<compile_context>
chip_gen: v7x
topology: tpu7x:2x2x1
jax: 0.10.0
libtpu: 0.0.40
codegen_flags: <defaults>
</compile_context>

<pallas_src>
import jax
import jax.numpy as jnp
from jax.experimental import pallas as pl
from jax.experimental.pallas import tpu as pltpu


def _lstm_kernel(x_ref, wi_ref, wh_ref, b_ref,        # inputs
                 out_ref, hfin_ref,                    # outputs
                 h_sc, c_sc, gx_sc):                   # VMEM scratch
    """Grid = (direction, time_block). direction 0 = forward, 1 = reverse.

    The reverse direction reads its x slab time-mirrored via the index_map and
    iterates the slab backwards, writing each step at the mirrored in-block
    index, so the fused output lands directly in natural time order.
    h/c carries persist in VMEM scratch across the (arbitrary) time axis.
    """
    d = pl.program_id(0)                 # direction
    t = pl.program_id(1)                 # time-block index (processing order)
    TB, B, H = out_ref.shape             # out block = (TB, B, H)

    @pl.when(t == 0)
    def _():
        h_sc[...] = jnp.zeros_like(h_sc)
        c_sc[...] = jnp.zeros_like(c_sc)

    # Hoisted input projection for the whole time block, bias folded in.
    # Gate order (i, f, g, o), matching PyTorch.
    gx_sc[...] = (
        jnp.dot(x_ref[...], wi_ref[0], preferred_element_type=jnp.float32)
        + b_ref[0])

    wh = wh_ref[0]                       # (H, 4H), hoisted out of the loop

    def step(s, carry):
        h, c = carry
        # in-block time index: s (forward) or TB-1-s (reverse)
        idx = (1 - d) * s + d * (TB - 1 - s)
        row = pl.multiple_of(idx * B, B)
        gates = gx_sc[pl.ds(row, B), :] + jnp.dot(
            h.astype(wh.dtype), wh, preferred_element_type=jnp.float32)
        i = jax.nn.sigmoid(gates[:, 0 * H:1 * H])
        f = jax.nn.sigmoid(gates[:, 1 * H:2 * H])
        g = jnp.tanh(gates[:, 2 * H:3 * H])
        o = jax.nn.sigmoid(gates[:, 3 * H:4 * H])
        c_new = f * c + i * g
        h_new = o * jnp.tanh(c_new)
        out_ref[idx] = h_new.astype(out_ref.dtype)
        return h_new, c_new

    h_fin, c_fin = jax.lax.fori_loop(
        0, TB, step, (h_sc[...], c_sc[...]), unroll=True)
    h_sc[...] = h_fin
    c_sc[...] = c_fin

    @pl.when(t == pl.num_programs(1) - 1)
    def _():
        hfin_ref[0] = h_fin              # resident accumulator -> final hidden


def lstm_encoder_pallas(x, params, *, time_block=8, mxu_dtype=jnp.float32,
                        vmem_limit_bytes=48 * 1024 * 1024):
    """x: (T, B, E) float32.  Returns (output (T, B, 2H) f32, hidden (2, B, H) f32)."""
    T, B, E = x.shape
    H = params["w_hh_f"].shape[0] // 4
    assert H % 128 == 0, (
        "fused (T,B,2H) output path requires per-direction H to be a multiple "
        "of 128 (lane-aligned gates / output halves)")

    # Pick a time-block size that divides T and keeps the x slab sublane-legal.
    TB = max(1, min(time_block, T))
    while T % TB != 0:
        TB -= 1
    if (TB * B) % 8 != 0 and TB != T:
        TB = T                            # block == full dim is always legal
    nT = T // TB

    # Glue: PyTorch gates = x @ W_ih^T + h @ W_hh^T + b_ih + b_hh.
    # Stack the two directions on a leading axis selected by the direction
    # grid coordinate; fold the two biases into one per direction.
    wi = jnp.stack([params["w_ih_f"].T, params["w_ih_r"].T]).astype(mxu_dtype)  # (2, E, 4H)
    wh = jnp.stack([params["w_hh_f"].T, params["w_hh_r"].T]).astype(mxu_dtype)  # (2, H, 4H)
    b = jnp.stack([
        (params["b_ih_f"] + params["b_hh_f"]).reshape(1, 4 * H),
        (params["b_ih_r"] + params["b_hh_r"]).reshape(1, 4 * H),
    ]).astype(jnp.float32)                                                      # (2, 1, 4H)
    x2d = jnp.asarray(x, jnp.float32).reshape(T * B, E).astype(mxu_dtype)       # free reshape

    def x_map(dd, tt):
        # processing-order block tt -> data time block (mirrored for reverse)
        return (tt + dd * (nT - 1 - 2 * tt), 0)

    def out_map(dd, tt):
        return (tt + dd * (nT - 1 - 2 * tt), 0, dd)   # feature block = direction half

    wmap = lambda dd, tt: (dd, 0, 0)

    grid_spec = pltpu.PrefetchScalarGridSpec(
        num_scalar_prefetch=0,
        grid=(2, nT),                                  # (direction, time blocks)
        in_specs=[
            pl.BlockSpec((TB * B, E), x_map),          # x slab for this block
            pl.BlockSpec((1, E, 4 * H), wmap),         # W_ih  (per direction)
            pl.BlockSpec((1, H, 4 * H), wmap),         # W_hh  (per direction)
            pl.BlockSpec((1, 1, 4 * H), wmap),         # fused bias
        ],
        out_specs=[
            pl.BlockSpec((TB, B, H), out_map),         # fused (T, B, 2H) output
            pl.BlockSpec((1, B, H), wmap),             # final hidden per direction
        ],
        scratch_shapes=[
            pltpu.VMEM((B, H), jnp.float32),           # h carry
            pltpu.VMEM((B, H), jnp.float32),           # c carry
            pltpu.VMEM((TB * B, 4 * H), jnp.float32),  # hoisted x projection
        ],
    )

    output, hidden = pl.pallas_call(
        _lstm_kernel,
        grid_spec=grid_spec,
        out_shape=(
            jax.ShapeDtypeStruct((T, B, 2 * H), jnp.float32),
            jax.ShapeDtypeStruct((2, B, H), jnp.float32),
        ),
        compiler_params=pltpu.CompilerParams(
            # directions are independent (2 TCs on v7x); time carries the
            # recurrence and the resident h/c/output accumulators.
            dimension_semantics=("parallel", "arbitrary"),
            vmem_limit_bytes=vmem_limit_bytes,
        ),
    )(x2d, wi, wh, b)
    return output, hidden


# --------------------- pure-JAX reference (for verification) ---------------------
def _lstm_ref(x, params):
    T, B, E = x.shape
    H = params["w_hh_f"].shape[0] // 4
    hp = jax.lax.Precision.HIGHEST

    def cell(carry, xt, wi, wh, b):
        h, c = carry
        g = (jnp.dot(xt, wi.T, precision=hp)
             + jnp.dot(h, wh.T, precision=hp) + b)
        i = jax.nn.sigmoid(g[:, 0 * H:1 * H])
        f = jax.nn.sigmoid(g[:, 1 * H:2 * H])
        gg = jnp.tanh(g[:, 2 * H:3 * H])
        o = jax.nn.sigmoid(g[:, 3 * H:4 * H])
        c = f * c + i * gg
        h = o * jnp.tanh(c)
        return (h, c), h

    h0 = jnp.zeros((B, H), jnp.float32)
    bf = params["b_ih_f"] + params["b_hh_f"]
    br = params["b_ih_r"] + params["b_hh_r"]
    (hF, _), out_f = jax.lax.scan(
        lambda c, xt: cell(c, xt, params["w_ih_f"], params["w_hh_f"], bf),
        (h0, h0), x)
    (hR, _), out_r = jax.lax.scan(
        lambda c, xt: cell(c, xt, params["w_ih_r"], params["w_hh_r"], br),
        (h0, h0), x[::-1])
    out = jnp.concatenate([out_f, out_r[::-1]], axis=-1)
    return out, jnp.stack([hF, hR], axis=0)


def init_params(key, embedding_dim, hidden_dim):
    H, E = hidden_dim, embedding_dim
    k = 1.0 / jnp.sqrt(H)
    names_shapes = [
        ("w_ih_f", (4 * H, E)), ("w_hh_f", (4 * H, H)),
        ("b_ih_f", (4 * H,)), ("b_hh_f", (4 * H,)),
        ("w_ih_r", (4 * H, E)), ("w_hh_r", (4 * H, H)),
        ("b_ih_r", (4 * H,)), ("b_hh_r", (4 * H,)),
    ]
    keys = jax.random.split(key, len(names_shapes))
    return {n: jax.random.uniform(kk, s, jnp.float32, -k, k)
            for (n, s), kk in zip(names_shapes, keys)}


if __name__ == "__main__":
    # Small but TPU-friendly shapes: seq=16, batch=8, embed=64, hidden=128
    # (H multiple of 128 keeps gate slices and the fused 2H output lane-aligned).
    T, B, E, H = 16, 8, 64, 128
    key = jax.random.PRNGKey(0)
    kp, kx = jax.random.split(key)
    params = init_params(kp, E, H)
    x = jax.random.normal(kx, (T, B, E), jnp.float32)

    ref_out, ref_hid = _lstm_ref(x, params)

    # f32 MXU path (numerically tight check).
    output, hidden = jax.block_until_ready(
        lstm_encoder_pallas(x, params, time_block=8))
    assert output.shape == (T, B, 2 * H) and hidden.shape == (2, B, H)
    assert jnp.allclose(output, ref_out, atol=1e-3, rtol=1e-3)
    assert jnp.allclose(hidden, ref_hid, atol=1e-3, rtol=1e-3)

    # bf16 MXU fast path (v6e/v7x): bf16 matmul operands, f32 accumulation and
    # f32 gate math (v5e-safe). Looser tolerance.
    out_bf, hid_bf = jax.block_until_ready(
        lstm_encoder_pallas(x, params, time_block=8, mxu_dtype=jnp.bfloat16))
    assert jnp.allclose(out_bf, ref_out, atol=1e-1, rtol=1e-1)
    assert jnp.allclose(hid_bf, ref_hid, atol=1e-1, rtol=1e-1)

    print("KERNEL_OK")
</pallas_src>

<mosaic_0001>
module attributes {stable_mosaic.version = 11 : i64} {
  func.func @_lstm_kernel(%arg0: i32, %arg1: i32, %arg2: memref<64x64xf32, #tpu.memory_space<vmem>>, %arg3: memref<1x64x512xf32, #tpu.memory_space<vmem>>, %arg4: memref<1x128x512xf32, #tpu.memory_space<vmem>>, %arg5: memref<1x1x512xf32, #tpu.memory_space<vmem>>, %arg6: memref<8x8x128xf32, #tpu.memory_space<vmem>>, %arg7: memref<1x8x128xf32, #tpu.memory_space<vmem>>, %arg8: memref<8x128xf32, #tpu.memory_space<vmem>>, %arg9: memref<8x128xf32, #tpu.memory_space<vmem>>, %arg10: memref<64x512xf32, #tpu.memory_space<vmem>>) attributes {dimension_semantics = [#tpu.dimension_semantics<parallel>, #tpu.dimension_semantics<arbitrary>], iteration_bounds = array<i64: 2, 2>, scalar_prefetch = 0 : i64, scratch_operands = 3 : i64, tpu.core_type = #tpu.core_type<tc>, window_params = [{transform_indices = @transform_0, window_bounds = array<i64: 64, 64>}, {transform_indices = @transform_1, window_bounds = array<i64: 1, 64, 512>}, {transform_indices = @transform_2, window_bounds = array<i64: 1, 128, 512>}, {transform_indices = @transform_3, window_bounds = array<i64: 1, 1, 512>}, {transform_indices = @transform_4, window_bounds = array<i64: 8, 8, 128>}, {transform_indices = @transform_5, window_bounds = array<i64: 1, 8, 128>}]} {
    %c0_i32 = arith.constant 0 : i32
    %0 = arith.cmpi eq, %arg1, %c0_i32 : i32
    %1 = arith.extui %0 : i1 to i32
    %c0_i32_0 = arith.constant 0 : i32
    %2 = arith.cmpi ne, %1, %c0_i32_0 : i32
    scf.if %2 {
      %cst_104 = arith.constant 0.000000e+00 : f32
      %341 = vector.broadcast %cst_104 : f32 to vector<8x128xf32>
      %c0_105 = arith.constant 0 : index
      %c0_106 = arith.constant 0 : index
      %342 = vector.load %arg8[%c0_105, %c0_106] : memref<8x128xf32, #tpu.memory_space<vmem>>, vector<8x128xf32>
      tpu.vector_store %arg8[%c0_105, %c0_106], %341 {strides = array<i32>} : memref<8x128xf32, #tpu.memory_space<vmem>>, vector<8x128xf32>,
      %cst_107 = arith.constant 0.000000e+00 : f32
      %343 = vector.broadcast %cst_107 : f32 to vector<8x128xf32>
      %c0_108 = arith.constant 0 : index
      %c0_109 = arith.constant 0 : index
      %344 = vector.load %arg9[%c0_108, %c0_109] : memref<8x128xf32, #tpu.memory_space<vmem>>, vector<8x128xf32>
      tpu.vector_store %arg9[%c0_108, %c0_109], %343 {strides = array<i32>} : memref<8x128xf32, #tpu.memory_space<vmem>>, vector<8x128xf32>,
    } else {
    }
    %c0 = arith.constant 0 : index
    %c0_1 = arith.constant 0 : index
    %3 = vector.load %arg2[%c0, %c0_1] : memref<64x64xf32, #tpu.memory_space<vmem>>, vector<64x64xf32>
    %c0_2 = arith.constant 0 : index
    %c0_3 = arith.constant 0 : index
    %c0_4 = arith.constant 0 : index
    %4 = vector.load %arg3[%c0_2, %c0_3, %c0_4] : memref<1x64x512xf32, #tpu.memory_space<vmem>>, vector<1x64x512xf32>
    %5 = vector.shape_cast %4 : vector<1x64x512xf32> to vector<64x512xf32>
    %cst = arith.constant dense<0.000000e+00> : vector<64x512xf32>
    %6 = tpu.matmul %3, %5, %cst {dimension_numbers = #tpu.dot_dimension_numbers<[1], [0], [0], [1], [0, 0, 1, 1], [], []>} : vector<64x64xf32>, vector<64x512xf32>, vector<64x512xf32> -> vector<64x512xf32>
    %c0_5 = arith.constant 0 : index
    %c0_6 = arith.constant 0 : index
    %c0_7 = arith.constant 0 : index
    %7 = vector.load %arg5[%c0_5, %c0_6, %c0_7] : memref<1x1x512xf32, #tpu.memory_space<vmem>>, vector<1x1x512xf32>
    %8 = vector.shape_cast %7 : vector<1x1x512xf32> to vector<1x512xf32>
    %9 = vector.broadcast %8 : vector<1x512xf32> to vector<64x512xf32>
    %10 = arith.addf %6, %9 : vector<64x512xf32>
    %c0_8 = arith.constant 0 : index
    %c0_9 = arith.constant 0 : index
    %11 = vector.load %arg10[%c0_8, %c0_9] : memref<64x512xf32, #tpu.memory_space<vmem>>, vector<64x512xf32>
    tpu.vector_store %arg10[%c0_8, %c0_9], %10 {strides = array<i32>} : memref<64x512xf32, #tpu.memory_space<vmem>>, vector<64x512xf32>,
    %c0_10 = arith.constant 0 : index
    %c0_11 = arith.constant 0 : index
    %c0_12 = arith.constant 0 : index
    %12 = vector.load %arg4[%c0_10, %c0_11, %c0_12] : memref<1x128x512xf32, #tpu.memory_space<vmem>>, vector<1x128x512xf32>
    %13 = vector.shape_cast %12 : vector<1x128x512xf32> to vector<128x512xf32>
    %c0_13 = arith.constant 0 : index
    %c0_14 = arith.constant 0 : index
    %14 = vector.load %arg8[%c0_13, %c0_14] : memref<8x128xf32, #tpu.memory_space<vmem>>, vector<8x128xf32>
    %c0_15 = arith.constant 0 : index
    %c0_16 = arith.constant 0 : index
    %15 = vector.load %arg9[%c0_15, %c0_16] : memref<8x128xf32, #tpu.memory_space<vmem>>, vector<8x128xf32>
    %c0_i32_17 = arith.constant 0 : i32
    %c1_i32 = arith.constant 1 : i32
    %16 = arith.subi %c1_i32, %arg0 : i32
    %17 = arith.muli %16, %c0_i32_17 : i32
    %c7_i32 = arith.constant 7 : i32
    %18 = arith.subi %c7_i32, %c0_i32_17 : i32
    %19 = arith.muli %arg0, %18 : i32
    %20 = arith.addi %17, %19 : i32
    %c8_i32 = arith.constant 8 : i32
    %21 = arith.muli %20, %c8_i32 : i32
    %22 = tpu.assume_multiple %21, 8 : i32
    %23 = arith.index_cast %22 : i32 to index
    %c0_18 = arith.constant 0 : index
    %24 = vector.load %arg10[%23, %c0_18] : memref<64x512xf32, #tpu.memory_space<vmem>>, vector<8x512xf32>
    %cst_19 = arith.constant dense<0.000000e+00> : vector<8x512xf32>
    %25 = tpu.matmul %14, %13, %cst_19 {dimension_numbers = #tpu.dot_dimension_numbers<[1], [0], [0], [1], [0, 0, 1, 1], [], []>} : vector<8x128xf32>, vector<128x512xf32>, vector<8x512xf32> -> vector<8x512xf32>
    %26 = arith.addf %24, %25 : vector<8x512xf32>
    %27 = vector.extract_strided_slice %26 {offsets = [0, 0], sizes = [8, 128], strides = [1, 1]} : vector<8x512xf32> to vector<8x128xf32>
    %28 = arith.negf %27 : vector<8x128xf32>
    %29 = math.exp %28 : vector<8x128xf32>
    %cst_20 = arith.constant 1.000000e+00 : f32
    %30 = vector.broadcast %cst_20 : f32 to vector<8x128xf32>
    %31 = arith.addf %30, %29 : vector<8x128xf32>
    %32 = arith.divf %30, %31 : vector<8x128xf32>
    %33 = vector.extract_strided_slice %26 {offsets = [0, 128], sizes = [8, 128], strides = [1, 1]} : vector<8x512xf32> to vector<8x128xf32>
    %34 = arith.negf %33 : vector<8x128xf32>
    %35 = math.exp %34 : vector<8x128xf32>
    %cst_21 = arith.constant 1.000000e+00 : f32
    %36 = vector.broadcast %cst_21 : f32 to vector<8x128xf32>
    %37 = arith.addf %36, %35 : vector<8x128xf32>
    %38 = arith.divf %36, %37 : vector<8x128xf32>
    %39 = vector.extract_strided_slice %26 {offsets = [0, 256], sizes = [8, 128], strides = [1, 1]} : vector<8x512xf32> to vector<8x128xf32>
    %40 = math.tanh %39 : vector<8x128xf32>
    %41 = vector.extract_strided_slice %26 {offsets = [0, 384], sizes = [8, 128], strides = [1, 1]} : vector<8x512xf32> to vector<8x128xf32>
    %42 = arith.negf %41 : vector<8x128xf32>
    %43 = math.exp %42 : vector<8x128xf32>
    %cst_22 = arith.constant 1.000000e+00 : f32
    %44 = vector.broadcast %cst_22 : f32 to vector<8x128xf32>
    %45 = arith.addf %44, %43 : vector<8x128xf32>
    %46 = arith.divf %44, %45 : vector<8x128xf32>
    %47 = arith.mulf %38, %15 : vector<8x128xf32>
    %48 = arith.mulf %32, %40 : vector<8x128xf32>
    %49 = arith.addf %47, %48 : vector<8x128xf32>
    %50 = math.tanh %49 : vector<8x128xf32>
    %51 = arith.mulf %46, %50 : vector<8x128xf32>
    %52 = arith.index_cast %20 : i32 to index
    %c0_23 = arith.constant 0 : index
    %c0_24 = arith.constant 0 : index
    %53 = vector.load %arg6[%52, %c0_23, %c0_24] : memref<8x8x128xf32, #tpu.memory_space<vmem>>, vector<1x8x128xf32>
    %54 = vector.shape_cast %53 : vector<1x8x128xf32> to vector<8x128xf32>
    %55 = vector.shape_cast %51 : vector<8x128xf32> to vector<1x8x128xf32>
    tpu.vector_store %arg6[%52, %c0_23, %c0_24], %55 {strides = array<i32>} : memref<8x8x128xf32, #tpu.memory_space<vmem>>, vector<1x8x128xf32>,
    %c1_i32_25 = arith.constant 1 : i32
    %c1_i32_26 = arith.constant 1 : i32
    %56 = arith.subi %c1_i32_26, %arg0 : i32
    %57 = arith.muli %56, %c1_i32_25 : i32
    %c7_i32_27 = arith.constant 7 : i32
    %58 = arith.subi %c7_i32_27, %c1_i32_25 : i32
    %59 = arith.muli %arg0, %58 : i32
    %60 = arith.addi %57, %59 : i32
    %c8_i32_28 = arith.constant 8 : i32
    %61 = arith.muli %60, %c8_i32_28 : i32
    %62 = tpu.assume_multiple %61, 8 : i32
    %63 = arith.index_cast %62 : i32 to index
    %c0_29 = arith.constant 0 : index
    %64 = vector.load %arg10[%63, %c0_29] : memref<64x512xf32, #tpu.memory_space<vmem>>, vector<8x512xf32>
    %cst_30 = arith.constant dense<0.000000e+00> : vector<8x512xf32>
    %65 = tpu.matmul %51, %13, %cst_30 {dimension_numbers = #tpu.dot_dimension_numbers<[1], [0], [0], [1], [0, 0, 1, 1], [], []>} : vector<8x128xf32>, vector<128x512xf32>, vector<8x512xf32> -> vector<8x512xf32>
    %66 = arith.addf %64, %65 : vector<8x512xf32>
    %67 = vector.extract_strided_slice %66 {offsets = [0, 0], sizes = [8, 128], strides = [1, 1]} : vector<8x512xf32> to vector<8x128xf32>
    %68 = arith.negf %67 : vector<8x128xf32>
    %69 = math.exp %68 : vector<8x128xf32>
    %cst_31 = arith.constant 1.000000e+00 : f32
    %70 = vector.broadcast %cst_31 : f32 to vector<8x128xf32>
    %71 = arith.addf %70, %69 : vector<8x128xf32>
    %72 = arith.divf %70, %71 : vector<8x128xf32>
    %73 = vector.extract_strided_slice %66 {offsets = [0, 128], sizes = [8, 128], strides = [1, 1]} : vector<8x512xf32> to vector<8x128xf32>
    %74 = arith.negf %73 : vector<8x128xf32>
    %75 = math.exp %74 : vector<8x128xf32>
    %cst_32 = arith.constant 1.000000e+00 : f32
    %76 = vector.broadcast %cst_32 : f32 to vector<8x128xf32>
    %77 = arith.addf %76, %75 : vector<8x128xf32>
    %78 = arith.divf %76, %77 : vector<8x128xf32>
    %79 = vector.extract_strided_slice %66 {offsets = [0, 256], sizes = [8, 128], strides = [1, 1]} : vector<8x512xf32> to vector<8x128xf32>
    %80 = math.tanh %79 : vector<8x128xf32>
    %81 = vector.extract_strided_slice %66 {offsets = [0, 384], sizes = [8, 128], strides = [1, 1]} : vector<8x512xf32> to vector<8x128xf32>
    %82 = arith.negf %81 : vector<8x128xf32>
    %83 = math.exp %82 : vector<8x128xf32>
    %cst_33 = arith.constant 1.000000e+00 : f32
    %84 = vector.broadcast %cst_33 : f32 to vector<8x128xf32>
    %85 = arith.addf %84, %83 : vector<8x128xf32>
    %86 = arith.divf %84, %85 : vector<8x128xf32>
    %87 = arith.mulf %78, %49 : vector<8x128xf32>
    %88 = arith.mulf %72, %80 : vector<8x128xf32>
    %89 = arith.addf %87, %88 : vector<8x128xf32>
    %90 = math.tanh %89 : vector<8x128xf32>
    %91 = arith.mulf %86, %90 : vector<8x128xf32>
    %92 = arith.index_cast %60 : i32 to index
    %c0_34 = arith.constant 0 : index
    %c0_35 = arith.constant 0 : index
    %93 = vector.load %arg6[%92, %c0_34, %c0_35] : memref<8x8x128xf32, #tpu.memory_space<vmem>>, vector<1x8x128xf32>
    %94 = vector.shape_cast %93 : vector<1x8x128xf32> to vector<8x128xf32>
    %95 = vector.shape_cast %91 : vector<8x128xf32> to vector<1x8x128xf32>
    tpu.vector_store %arg6[%92, %c0_34, %c0_35], %95 {strides = array<i32>} : memref<8x8x128xf32, #tpu.memory_space<vmem>>, vector<1x8x128xf32>,
    %c2_i32 = arith.constant 2 : i32
    %c1_i32_36 = arith.constant 1 : i32
    %96 = arith.subi %c1_i32_36, %arg0 : i32
    %97 = arith.muli %96, %c2_i32 : i32
    %c7_i32_37 = arith.constant 7 : i32
    %98 = arith.subi %c7_i32_37, %c2_i32 : i32
    %99 = arith.muli %arg0, %98 : i32
    %100 = arith.addi %97, %99 : i32
    %c8_i32_38 = arith.constant 8 : i32
    %101 = arith.muli %100, %c8_i32_38 : i32
    %102 = tpu.assume_multiple %101, 8 : i32
    %103 = arith.index_cast %102 : i32 to index
    %c0_39 = arith.constant 0 : index
    %104 = vector.load %arg10[%103, %c0_39] : memref<64x512xf32, #tpu.memory_space<vmem>>, vector<8x512xf32>
    %cst_40 = arith.constant dense<0.000000e+00> : vector<8x512xf32>
    %105 = tpu.matmul %91, %13, %cst_40 {dimension_numbers = #tpu.dot_dimension_numbers<[1], [0], [0], [1], [0, 0, 1, 1], [], []>} : vector<8x128xf32>, vector<128x512xf32>, vector<8x512xf32> -> vector<8x512xf32>
    %106 = arith.addf %104, %105 : vector<8x512xf32>
    %107 = vector.extract_strided_slice %106 {offsets = [0, 0], sizes = [8, 128], strides = [1, 1]} : vector<8x512xf32> to vector<8x128xf32>
    %108 = arith.negf %107 : vector<8x128xf32>
    %109 = math.exp %108 : vector<8x128xf32>
    %cst_41 = arith.constant 1.000000e+00 : f32
    %110 = vector.broadcast %cst_41 : f32 to vector<8x128xf32>
    %111 = arith.addf %110, %109 : vector<8x128xf32>
    %112 = arith.divf %110, %111 : vector<8x128xf32>
    %113 = vector.extract_strided_slice %106 {offsets = [0, 128], sizes = [8, 128], strides = [1, 1]} : vector<8x512xf32> to vector<8x128xf32>
    %114 = arith.negf %113 : vector<8x128xf32>
    %115 = math.exp %114 : vector<8x128xf32>
    %cst_42 = arith.constant 1.000000e+00 : f32
    %116 = vector.broadcast %cst_42 : f32 to vector<8x128xf32>
    %117 = arith.addf %116, %115 : vector<8x128xf32>
    %118 = arith.divf %116, %117 : vector<8x128xf32>
    %119 = vector.extract_strided_slice %106 {offsets = [0, 256], sizes = [8, 128], strides = [1, 1]} : vector<8x512xf32> to vector<8x128xf32>
    %120 = math.tanh %119 : vector<8x128xf32>
    %121 = vector.extract_strided_slice %106 {offsets = [0, 384], sizes = [8, 128], strides = [1, 1]} : vector<8x512xf32> to vector<8x128xf32>
    %122 = arith.negf %121 : vector<8x128xf32>
    %123 = math.exp %122 : vector<8x128xf32>
    %cst_43 = arith.constant 1.000000e+00 : f32
    %124 = vector.broadcast %cst_43 : f32 to vector<8x128xf32>
    %125 = arith.addf %124, %123 : vector<8x128xf32>
    %126 = arith.divf %124, %125 : vector<8x128xf32>
    %127 = arith.mulf %118, %89 : vector<8x128xf32>
    %128 = arith.mulf %112, %120 : vector<8x128xf32>
    %129 = arith.addf %127, %128 : vector<8x128xf32>
    %130 = math.tanh %129 : vector<8x128xf32>
    %131 = arith.mulf %126, %130 : vector<8x128xf32>
    %132 = arith.index_cast %100 : i32 to index
    %c0_44 = arith.constant 0 : index
    %c0_45 = arith.constant 0 : index
    %133 = vector.load %arg6[%132, %c0_44, %c0_45] : memref<8x8x128xf32, #tpu.memory_space<vmem>>, vector<1x8x128xf32>
    %134 = vector.shape_cast %133 : vector<1x8x128xf32> to vector<8x128xf32>
    %135 = vector.shape_cast %131 : vector<8x128xf32> to vector<1x8x128xf32>
    tpu.vector_store %arg6[%132, %c0_44, %c0_45], %135 {strides = array<i32>} : memref<8x8x128xf32, #tpu.memory_space<vmem>>, vector<1x8x128xf32>,
    %c3_i32 = arith.constant 3 : i32
    %c1_i32_46 = arith.constant 1 : i32
    %136 = arith.subi %c1_i32_46, %arg0 : i32
    %137 = arith.muli %136, %c3_i32 : i32
    %c7_i32_47 = arith.constant 7 : i32
    %138 = arith.subi %c7_i32_47, %c3_i32 : i32
    %139 = arith.muli %arg0, %138 : i32
    %140 = arith.addi %137, %139 : i32
    %c8_i32_48 = arith.constant 8 : i32
    %141 = arith.muli %140, %c8_i32_48 : i32
    %142 = tpu.assume_multiple %141, 8 : i32
    %143 = arith.index_cast %142 : i32 to index
    %c0_49 = arith.constant 0 : index
    %144 = vector.load %arg10[%143, %c0_49] : memref<64x512xf32, #tpu.memory_space<vmem>>, vector<8x512xf32>
    %cst_50 = arith.constant dense<0.000000e+00> : vector<8x512xf32>
    %145 = tpu.matmul %131, %13, %cst_50 {dimension_numbers = #tpu.dot_dimension_numbers<[1], [0], [0], [1], [0, 0, 1, 1], [], []>} : vector<8x128xf32>, vector<128x512xf32>, vector<8x512xf32> -> vector<8x512xf32>
    %146 = arith.addf %144, %145 : vector<8x512xf32>
    %147 = vector.extract_strided_slice %146 {offsets = [0, 0], sizes = [8, 128], strides = [1, 1]} : vector<8x512xf32> to vector<8x128xf32>
    %148 = arith.negf %147 : vector<8x128xf32>
    %149 = math.exp %148 : vector<8x128xf32>
    %cst_51 = arith.constant 1.000000e+00 : f32
    %150 = vector.broadcast %cst_51 : f32 to vector<8x128xf32>
    %151 = arith.addf %150, %149 : vector<8x128xf32>
    %152 = arith.divf %150, %151 : vector<8x128xf32>
    %153 = vector.extract_strided_slice %146 {offsets = [0, 128], sizes = [8, 128], strides = [1, 1]} : vector<8x512xf32> to vector<8x128xf32>
    %154 = arith.negf %153 : vector<8x128xf32>
    %155 = math.exp %154 : vector<8x128xf32>
    %cst_52 = arith.constant 1.000000e+00 : f32
    %156 = vector.broadcast %cst_52 : f32 to vector<8x128xf32>
    %157 = arith.addf %156, %155 : vector<8x128xf32>
    %158 = arith.divf %156, %157 : vector<8x128xf32>
    %159 = vector.extract_strided_slice %146 {offsets = [0, 256], sizes = [8, 128], strides = [1, 1]} : vector<8x512xf32> to vector<8x128xf32>
    %160 = math.tanh %159 : vector<8x128xf32>
    %161 = vector.extract_strided_slice %146 {offsets = [0, 384], sizes = [8, 128], strides = [1, 1]} : vector<8x512xf32> to vector<8x128xf32>
    %162 = arith.negf %161 : vector<8x128xf32>
    %163 = math.exp %162 : vector<8x128xf32>
    %cst_53 = arith.constant 1.000000e+00 : f32
    %164 = vector.broadcast %cst_53 : f32 to vector<8x128xf32>
    %165 = arith.addf %164, %163 : vector<8x128xf32>
    %166 = arith.divf %164, %165 : vector<8x128xf32>
    %167 = arith.mulf %158, %129 : vector<8x128xf32>
    %168 = arith.mulf %152, %160 : vector<8x128xf32>
    %169 = arith.addf %167, %168 : vector<8x128xf32>
    %170 = math.tanh %169 : vector<8x128xf32>
    %171 = arith.mulf %166, %170 : vector<8x128xf32>
    %172 = arith.index_cast %140 : i32 to index
    %c0_54 = arith.constant 0 : index
    %c0_55 = arith.constant 0 : index
    %173 = vector.load %arg6[%172, %c0_54, %c0_55] : memref<8x8x128xf32, #tpu.memory_space<vmem>>, vector<1x8x128xf32>
    %174 = vector.shape_cast %173 : vector<1x8x128xf32> to vector<8x128xf32>
    %175 = vector.shape_cast %171 : vector<8x128xf32> to vector<1x8x128xf32>
    tpu.vector_store %arg6[%172, %c0_54, %c0_55], %175 {strides = array<i32>} : memref<8x8x128xf32, #tpu.memory_space<vmem>>, vector<1x8x128xf32>,
    %c4_i32 = arith.constant 4 : i32
    %c1_i32_56 = arith.constant 1 : i32
    %176 = arith.subi %c1_i32_56, %arg0 : i32
    %177 = arith.muli %176, %c4_i32 : i32
    %c7_i32_57 = arith.constant 7 : i32
    %178 = arith.subi %c7_i32_57, %c4_i32 : i32
    %179 = arith.muli %arg0, %178 : i32
    %180 = arith.addi %177, %179 : i32
    %c8_i32_58 = arith.constant 8 : i32
    %181 = arith.muli %180, %c8_i32_58 : i32
    %182 = tpu.assume_multiple %181, 8 : i32
    %183 = arith.index_cast %182 : i32 to index
    %c0_59 = arith.constant 0 : index
    %184 = vector.load %arg10[%183, %c0_59] : memref<64x512xf32, #tpu.memory_space<vmem>>, vector<8x512xf32>
    %cst_60 = arith.constant dense<0.000000e+00> : vector<8x512xf32>
    %185 = tpu.matmul %171, %13, %cst_60 {dimension_numbers = #tpu.dot_dimension_numbers<[1], [0], [0], [1], [0, 0, 1, 1], [], []>} : vector<8x128xf32>, vector<128x512xf32>, vector<8x512xf32> -> vector<8x512xf32>
    %186 = arith.addf %184, %185 : vector<8x512xf32>
    %187 = vector.extract_strided_slice %186 {offsets = [0, 0], sizes = [8, 128], strides = [1, 1]} : vector<8x512xf32> to vector<8x128xf32>
    %188 = arith.negf %187 : vector<8x128xf32>
    %189 = math.exp %188 : vector<8x128xf32>
    %cst_61 = arith.constant 1.000000e+00 : f32
    %190 = vector.broadcast %cst_61 : f32 to vector<8x128xf32>
    %191 = arith.addf %190, %189 : vector<8x128xf32>
    %192 = arith.divf %190, %191 : vector<8x128xf32>
    %193 = vector.extract_strided_slice %186 {offsets = [0, 128], sizes = [8, 128], strides = [1, 1]} : vector<8x512xf32> to vector<8x128xf32>
    %194 = arith.negf %193 : vector<8x128xf32>
    %195 = math.exp %194 : vector<8x128xf32>
    %cst_62 = arith.constant 1.000000e+00 : f32
    %196 = vector.broadcast %cst_62 : f32 to vector<8x128xf32>
    %197 = arith.addf %196, %195 : vector<8x128xf32>
    %198 = arith.divf %196, %197 : vector<8x128xf32>
    %199 = vector.extract_strided_slice %186 {offsets = [0, 256], sizes = [8, 128], strides = [1, 1]} : vector<8x512xf32> to vector<8x128xf32>
    %200 = math.tanh %199 : vector<8x128xf32>
    %201 = vector.extract_strided_slice %186 {offsets = [0, 384], sizes = [8, 128], strides = [1, 1]} : vector<8x512xf32> to vector<8x128xf32>
    %202 = arith.negf %201 : vector<8x128xf32>
    %203 = math.exp %202 : vector<8x128xf32>
    %cst_63 = arith.constant 1.000000e+00 : f32
    %204 = vector.broadcast %cst_63 : f32 to vector<8x128xf32>
    %205 = arith.addf %204, %203 : vector<8x128xf32>
    %206 = arith.divf %204, %205 : vector<8x128xf32>
    %207 = arith.mulf %198, %169 : vector<8x128xf32>
    %208 = arith.mulf %192, %200 : vector<8x128xf32>
    %209 = arith.addf %207, %208 : vector<8x128xf32>
    %210 = math.tanh %209 : vector<8x128xf32>
    %211 = arith.mulf %206, %210 : vector<8x128xf32>
    %212 = arith.index_cast %180 : i32 to index
    %c0_64 = arith.constant 0 : index
    %c0_65 = arith.constant 0 : index
    %213 = vector.load %arg6[%212, %c0_64, %c0_65] : memref<8x8x128xf32, #tpu.memory_space<vmem>>, vector<1x8x128xf32>
    %214 = vector.shape_cast %213 : vector<1x8x128xf32> to vector<8x128xf32>
    %215 = vector.shape_cast %211 : vector<8x128xf32> to vector<1x8x128xf32>
    tpu.vector_store %arg6[%212, %c0_64, %c0_65], %215 {strides = array<i32>} : memref<8x8x128xf32, #tpu.memory_space<vmem>>, vector<1x8x128xf32>,
    %c5_i32 = arith.constant 5 : i32
    %c1_i32_66 = arith.constant 1 : i32
    %216 = arith.subi %c1_i32_66, %arg0 : i32
    %217 = arith.muli %216, %c5_i32 : i32
    %c7_i32_67 = arith.constant 7 : i32
    %218 = arith.subi %c7_i32_67, %c5_i32 : i32
    %219 = arith.muli %arg0, %218 : i32
    %220 = arith.addi %217, %219 : i32
    %c8_i32_68 = arith.constant 8 : i32
    %221 = arith.muli %220, %c8_i32_68 : i32
    %222 = tpu.assume_multiple %221, 8 : i32
    %223 = arith.index_cast %222 : i32 to index
    %c0_69 = arith.constant 0 : index
    %224 = vector.load %arg10[%223, %c0_69] : memref<64x512xf32, #tpu.memory_space<vmem>>, vector<8x512xf32>
    %cst_70 = arith.constant dense<0.000000e+00> : vector<8x512xf32>
    %225 = tpu.matmul %211, %13, %cst_70 {dimension_numbers = #tpu.dot_dimension_numbers<[1], [0], [0], [1], [0, 0, 1, 1], [], []>} : vector<8x128xf32>, vector<128x512xf32>, vector<8x512xf32> -> vector<8x512xf32>
    %226 = arith.addf %224, %225 : vector<8x512xf32>
    %227 = vector.extract_strided_slice %226 {offsets = [0, 0], sizes = [8, 128], strides = [1, 1]} : vector<8x512xf32> to vector<8x128xf32>
    %228 = arith.negf %227 : vector<8x128xf32>
    %229 = math.exp %228 : vector<8x128xf32>
    %cst_71 = arith.constant 1.000000e+00 : f32
    %230 = vector.broadcast %cst_71 : f32 to vector<8x128xf32>
    %231 = arith.addf %230, %229 : vector<8x128xf32>
    %232 = arith.divf %230, %231 : vector<8x128xf32>
    %233 = vector.extract_strided_slice %226 {offsets = [0, 128], sizes = [8, 128], strides = [1, 1]} : vector<8x512xf32> to vector<8x128xf32>
    %234 = arith.negf %233 : vector<8x128xf32>
    %235 = math.exp %234 : vector<8x128xf32>
    %cst_72 = arith.constant 1.000000e+00 : f32
    %236 = vector.broadcast %cst_72 : f32 to vector<8x128xf32>
    %237 = arith.addf %236, %235 : vector<8x128xf32>
    %238 = arith.divf %236, %237 : vector<8x128xf32>
    %239 = vector.extract_strided_slice %226 {offsets = [0, 256], sizes = [8, 128], strides = [1, 1]} : vector<8x512xf32> to vector<8x128xf32>
    %240 = math.tanh %239 : vector<8x128xf32>
    %241 = vector.extract_strided_slice %226 {offsets = [0, 384], sizes = [8, 128], strides = [1, 1]} : vector<8x512xf32> to vector<8x128xf32>
    %242 = arith.negf %241 : vector<8x128xf32>
    %243 = math.exp %242 : vector<8x128xf32>
    %cst_73 = arith.constant 1.000000e+00 : f32
    %244 = vector.broadcast %cst_73 : f32 to vector<8x128xf32>
    %245 = arith.addf %244, %243 : vector<8x128xf32>
    %246 = arith.divf %244, %245 : vector<8x128xf32>
    %247 = arith.mulf %238, %209 : vector<8x128xf32>
    %248 = arith.mulf %232, %240 : vector<8x128xf32>
    %249 = arith.addf %247, %248 : vector<8x128xf32>
    %250 = math.tanh %249 : vector<8x128xf32>
    %251 = arith.mulf %246, %250 : vector<8x128xf32>
    %252 = arith.index_cast %220 : i32 to index
    %c0_74 = arith.constant 0 : index
    %c0_75 = arith.constant 0 : index
    %253 = vector.load %arg6[%252, %c0_74, %c0_75] : memref<8x8x128xf32, #tpu.memory_space<vmem>>, vector<1x8x128xf32>
    %254 = vector.shape_cast %253 : vector<1x8x128xf32> to vector<8x128xf32>
    %255 = vector.shape_cast %251 : vector<8x128xf32> to vector<1x8x128xf32>
    tpu.vector_store %arg6[%252, %c0_74, %c0_75], %255 {strides = array<i32>} : memref<8x8x128xf32, #tpu.memory_space<vmem>>, vector<1x8x128xf32>,
    %c6_i32 = arith.constant 6 : i32
    %c1_i32_76 = arith.constant 1 : i32
    %256 = arith.subi %c1_i32_76, %arg0 : i32
    %257 = arith.muli %256, %c6_i32 : i32
    %c7_i32_77 = arith.constant 7 : i32
    %258 = arith.subi %c7_i32_77, %c6_i32 : i32
    %259 = arith.muli %arg0, %258 : i32
    %260 = arith.addi %257, %259 : i32
    %c8_i32_78 = arith.constant 8 : i32
    %261 = arith.muli %260, %c8_i32_78 : i32
    %262 = tpu.assume_multiple %261, 8 : i32
    %263 = arith.index_cast %262 : i32 to index
    %c0_79 = arith.constant 0 : index
    %264 = vector.load %arg10[%263, %c0_79] : memref<64x512xf32, #tpu.memory_space<vmem>>, vector<8x512xf32>
    %cst_80 = arith.constant dense<0.000000e+00> : vector<8x512xf32>
    %265 = tpu.matmul %251, %13, %cst_80 {dimension_numbers = #tpu.dot_dimension_numbers<[1], [0], [0], [1], [0, 0, 1, 1], [], []>} : vector<8x128xf32>, vector<128x512xf32>, vector<8x512xf32> -> vector<8x512xf32>
    %266 = arith.addf %264, %265 : vector<8x512xf32>
    %267 = vector.extract_strided_slice %266 {offsets = [0, 0], sizes = [8, 128], strides = [1, 1]} : vector<8x512xf32> to vector<8x128xf32>
    %268 = arith.negf %267 : vector<8x128xf32>
    %269 = math.exp %268 : vector<8x128xf32>
    %cst_81 = arith.constant 1.000000e+00 : f32
    %270 = vector.broadcast %cst_81 : f32 to vector<8x128xf32>
    %271 = arith.addf %270, %269 : vector<8x128xf32>
    %272 = arith.divf %270, %271 : vector<8x128xf32>
    %273 = vector.extract_strided_slice %266 {offsets = [0, 128], sizes = [8, 128], strides = [1, 1]} : vector<8x512xf32> to vector<8x128xf32>
    %274 = arith.negf %273 : vector<8x128xf32>
    %275 = math.exp %274 : vector<8x128xf32>
    %cst_82 = arith.constant 1.000000e+00 : f32
    %276 = vector.broadcast %cst_82 : f32 to vector<8x128xf32>
    %277 = arith.addf %276, %275 : vector<8x128xf32>
    %278 = arith.divf %276, %277 : vector<8x128xf32>
    %279 = vector.extract_strided_slice %266 {offsets = [0, 256], sizes = [8, 128], strides = [1, 1]} : vector<8x512xf32> to vector<8x128xf32>
    %280 = math.tanh %279 : vector<8x128xf32>
    %281 = vector.extract_strided_slice %266 {offsets = [0, 384], sizes = [8, 128], strides = [1, 1]} : vector<8x512xf32> to vector<8x128xf32>
    %282 = arith.negf %281 : vector<8x128xf32>
    %283 = math.exp %282 : vector<8x128xf32>
    %cst_83 = arith.constant 1.000000e+00 : f32
    %284 = vector.broadcast %cst_83 : f32 to vector<8x128xf32>
    %285 = arith.addf %284, %283 : vector<8x128xf32>
    %286 = arith.divf %284, %285 : vector<8x128xf32>
    %287 = arith.mulf %278, %249 : vector<8x128xf32>
    %288 = arith.mulf %272, %280 : vector<8x128xf32>
    %289 = arith.addf %287, %288 : vector<8x128xf32>
    %290 = math.tanh %289 : vector<8x128xf32>
    %291 = arith.mulf %286, %290 : vector<8x128xf32>
    %292 = arith.index_cast %260 : i32 to index
    %c0_84 = arith.constant 0 : index
    %c0_85 = arith.constant 0 : index
    %293 = vector.load %arg6[%292, %c0_84, %c0_85] : memref<8x8x128xf32, #tpu.memory_space<vmem>>, vector<1x8x128xf32>
    %294 = vector.shape_cast %293 : vector<1x8x128xf32> to vector<8x128xf32>
    %295 = vector.shape_cast %291 : vector<8x128xf32> to vector<1x8x128xf32>
    tpu.vector_store %arg6[%292, %c0_84, %c0_85], %295 {strides = array<i32>} : memref<8x8x128xf32, #tpu.memory_space<vmem>>, vector<1x8x128xf32>,
    %c7_i32_86 = arith.constant 7 : i32
    %c1_i32_87 = arith.constant 1 : i32
    %296 = arith.subi %c1_i32_87, %arg0 : i32
    %297 = arith.muli %296, %c7_i32_86 : i32
    %c7_i32_88 = arith.constant 7 : i32
    %298 = arith.subi %c7_i32_88, %c7_i32_86 : i32
    %299 = arith.muli %arg0, %298 : i32
    %300 = arith.addi %297, %299 : i32
    %c8_i32_89 = arith.constant 8 : i32
    %301 = arith.muli %300, %c8_i32_89 : i32
    %302 = tpu.assume_multiple %301, 8 : i32
    %303 = arith.index_cast %302 : i32 to index
    %c0_90 = arith.constant 0 : index
    %304 = vector.load %arg10[%303, %c0_90] : memref<64x512xf32, #tpu.memory_space<vmem>>, vector<8x512xf32>
    %cst_91 = arith.constant dense<0.000000e+00> : vector<8x512xf32>
    %305 = tpu.matmul %291, %13, %cst_91 {dimension_numbers = #tpu.dot_dimension_numbers<[1], [0], [0], [1], [0, 0, 1, 1], [], []>} : vector<8x128xf32>, vector<128x512xf32>, vector<8x512xf32> -> vector<8x512xf32>
    %306 = arith.addf %304, %305 : vector<8x512xf32>
    %307 = vector.extract_strided_slice %306 {offsets = [0, 0], sizes = [8, 128], strides = [1, 1]} : vector<8x512xf32> to vector<8x128xf32>
    %308 = arith.negf %307 : vector<8x128xf32>
    %309 = math.exp %308 : vector<8x128xf32>
    %cst_92 = arith.constant 1.000000e+00 : f32
    %310 = vector.broadcast %cst_92 : f32 to vector<8x128xf32>
    %311 = arith.addf %310, %309 : vector<8x128xf32>
    %312 = arith.divf %310, %311 : vector<8x128xf32>
    %313 = vector.extract_strided_slice %306 {offsets = [0, 128], sizes = [8, 128], strides = [1, 1]} : vector<8x512xf32> to vector<8x128xf32>
    %314 = arith.negf %313 : vector<8x128xf32>
    %315 = math.exp %314 : vector<8x128xf32>
    %cst_93 = arith.constant 1.000000e+00 : f32
    %316 = vector.broadcast %cst_93 : f32 to vector<8x128xf32>
    %317 = arith.addf %316, %315 : vector<8x128xf32>
    %318 = arith.divf %316, %317 : vector<8x128xf32>
    %319 = vector.extract_strided_slice %306 {offsets = [0, 256], sizes = [8, 128], strides = [1, 1]} : vector<8x512xf32> to vector<8x128xf32>
    %320 = math.tanh %319 : vector<8x128xf32>
    %321 = vector.extract_strided_slice %306 {offsets = [0, 384], sizes = [8, 128], strides = [1, 1]} : vector<8x512xf32> to vector<8x128xf32>
    %322 = arith.negf %321 : vector<8x128xf32>
    %323 = math.exp %322 : vector<8x128xf32>
    %cst_94 = arith.constant 1.000000e+00 : f32
    %324 = vector.broadcast %cst_94 : f32 to vector<8x128xf32>
    %325 = arith.addf %324, %323 : vector<8x128xf32>
    %326 = arith.divf %324, %325 : vector<8x128xf32>
    %327 = arith.mulf %318, %289 : vector<8x128xf32>
    %328 = arith.mulf %312, %320 : vector<8x128xf32>
    %329 = arith.addf %327, %328 : vector<8x128xf32>
    %330 = math.tanh %329 : vector<8x128xf32>
    %331 = arith.mulf %326, %330 : vector<8x128xf32>
    %332 = arith.index_cast %300 : i32 to index
    %c0_95 = arith.constant 0 : index
    %c0_96 = arith.constant 0 : index
    %333 = vector.load %arg6[%332, %c0_95, %c0_96] : memref<8x8x128xf32, #tpu.memory_space<vmem>>, vector<1x8x128xf32>
    %334 = vector.shape_cast %333 : vector<1x8x128xf32> to vector<8x128xf32>
    %335 = vector.shape_cast %331 : vector<8x128xf32> to vector<1x8x128xf32>
    tpu.vector_store %arg6[%332, %c0_95, %c0_96], %335 {strides = array<i32>} : memref<8x8x128xf32, #tpu.memory_space<vmem>>, vector<1x8x128xf32>,
    %c8_i32_97 = arith.constant 8 : i32
    %c0_98 = arith.constant 0 : index
    %c0_99 = arith.constant 0 : index
    %336 = vector.load %arg8[%c0_98, %c0_99] : memref<8x128xf32, #tpu.memory_space<vmem>>, vector<8x128xf32>
    tpu.vector_store %arg8[%c0_98, %c0_99], %331 {strides = array<i32>} : memref<8x128xf32, #tpu.memory_space<vmem>>, vector<8x128xf32>,
    %c0_100 = arith.constant 0 : index
    %c0_101 = arith.constant 0 : index
    %337 = vector.load %arg9[%c0_100, %c0_101] : memref<8x128xf32, #tpu.memory_space<vmem>>, vector<8x128xf32>
    tpu.vector_store %arg9[%c0_100, %c0_101], %329 {strides = array<i32>} : memref<8x128xf32, #tpu.memory_space<vmem>>, vector<8x128xf32>,
    %c1_i32_102 = arith.constant 1 : i32
    %338 = arith.cmpi eq, %arg1, %c1_i32_102 : i32
    %339 = arith.extui %338 : i1 to i32
    %c0_i32_103 = arith.constant 0 : i32
    %340 = arith.cmpi ne, %339, %c0_i32_103 : i32
    scf.if %340 {
      %c0_104 = arith.constant 0 : index
      %c0_105 = arith.constant 0 : index
      %c0_106 = arith.constant 0 : index
      %341 = vector.load %arg7[%c0_104, %c0_105, %c0_106] : memref<1x8x128xf32, #tpu.memory_space<vmem>>, vector<1x8x128xf32>
      %342 = vector.shape_cast %341 : vector<1x8x128xf32> to vector<8x128xf32>
      %343 = vector.shape_cast %331 : vector<8x128xf32> to vector<1x8x128xf32>
      tpu.vector_store %arg7[%c0_104, %c0_105, %c0_106], %343 {strides = array<i32>} : memref<1x8x128xf32, #tpu.memory_space<vmem>>, vector<1x8x128xf32>,
    } else {
    }
    return
  }
  func.func @transform_0(%arg0: i32, %arg1: i32) -> (i32, i32) {
    %c2_i32 = arith.constant 2 : i32
    %0 = arith.muli %c2_i32, %arg1 : i32
    %c1_i32 = arith.constant 1 : i32
    %1 = arith.subi %c1_i32, %0 : i32
    %2 = arith.muli %arg0, %1 : i32
    %3 = arith.addi %arg1, %2 : i32
    %c0_i32 = arith.constant 0 : i32
    %c0_i32_0 = arith.constant 0 : i32
    return %3, %c0_i32 : i32, i32
  }
  func.func @transform_1(%arg0: i32, %arg1: i32) -> (i32, i32, i32) {
    %c0_i32 = arith.constant 0 : i32
    %c0_i32_0 = arith.constant 0 : i32
    %c0_i32_1 = arith.constant 0 : i32
    return %arg0, %c0_i32, %c0_i32_0 : i32, i32, i32
  }
  func.func @transform_2(%arg0: i32, %arg1: i32) -> (i32, i32, i32) {
    %c0_i32 = arith.constant 0 : i32
    %c0_i32_0 = arith.constant 0 : i32
    %c0_i32_1 = arith.constant 0 : i32
    return %arg0, %c0_i32, %c0_i32_0 : i32, i32, i32
  }
  func.func @transform_3(%arg0: i32, %arg1: i32) -> (i32, i32, i32) {
    %c0_i32 = arith.constant 0 : i32
    %c0_i32_0 = arith.constant 0 : i32
    %c0_i32_1 = arith.constant 0 : i32
    return %arg0, %c0_i32, %c0_i32_0 : i32, i32, i32
  }
  func.func @transform_4(%arg0: i32, %arg1: i32) -> (i32, i32, i32) {
    %c2_i32 = arith.constant 2 : i32
    %0 = arith.muli %c2_i32, %arg1 : i32
    %c1_i32 = arith.constant 1 : i32
    %1 = arith.subi %c1_i32, %0 : i32
    %2 = arith.muli %arg0, %1 : i32
    %3 = arith.addi %arg1, %2 : i32
    %c0_i32 = arith.constant 0 : i32
    %c0_i32_0 = arith.constant 0 : i32
    return %3, %c0_i32, %arg0 : i32, i32, i32
  }
  func.func @transform_5(%arg0: i32, %arg1: i32) -> (i32, i32, i32) {
    %c0_i32 = arith.constant 0 : i32
    %c0_i32_0 = arith.constant 0 : i32
    %c0_i32_1 = arith.constant 0 : i32
    return %arg0, %c0_i32, %c0_i32_0 : i32, i32, i32
  }
}

</mosaic_0001>

<llo_original>
// kernel: tpu_custom_call.1
$region0: #{tpu_custom_call.1}
  #allocation0 [shape = 'u32[]', space=smem, size = 0x4, offset = 0x4, fixed_abs, tag = 'smem constant byte address 0x4 - core index']
  #allocation1 [shape = 'u32[144,128]{1,0:T(1,128)}', space=vmem, size = 0x12000, scoped, tag = 'internal scratch']
  #allocation2 [shape = 'f32[8,128]{1,0:T(8,128)}', space=vmem, size = 0x1000, scoped, tag = 'scratch operand']
  #allocation3 [shape = 'f32[8,128]{1,0:T(8,128)}', space=vmem, size = 0x1000, scoped, tag = 'scratch operand']
  #allocation4 [shape = 'f32[64,512]{1,0:T(8,128)}', space=vmem, size = 0x20000, scoped, tag = 'scratch operand']
  %s0 = inlined_call_operand.vmem [shape: f32[128,64], index: 0, kind: input, shape index: {}]
  %s1 = inlined_call_operand.hbm [shape: f32[2,64,512], index: 1, kind: input, shape index: {}]
  %s2 = inlined_call_operand.hbm [shape: f32[2,128,512], index: 2, kind: input, shape index: {}]
  %s3 = inlined_call_operand.vmem [shape: f32[2,1,512], index: 3, kind: input, shape index: {}]
  %s4 = inlined_call_operand.hbm [shape: f32[16,8,256], index: 4, kind: output, shape index: {0}]
  %s5 = inlined_call_operand.hbm [shape: f32[2,8,128], index: 5, kind: output, shape index: {1}]
  %6 = xla_tuple %s4, %s5
  %s7 = sld [smem:[#allocation0]]
  $region73: #{tpu_custom_call.1} parent=0
    _
  %s9 = ssub.s32 1, %s7
  %s10 = scalar_select 0, %s9, %s7
  $region1: #{tpu_custom_call.1} parent=0
    #allocation5 [shape = 'u8[262144]{0}', space=vmem, size = 0x40000, scoped, tag = 'input window, operand 1']
    #allocation6 [shape = 's32[2]{0}', space=sflag, size = 0x8, scoped, tag = 'scoped memory for tpu_custom_call.1']
    #allocation7 [shape = 's32[2]{0}', space=sflag, size = 0x8, scoped, tag = 'scoped memory for tpu_custom_call.1']
    #allocation8 [shape = 'u8[524288]{0}', space=vmem, size = 0x80000, scoped, tag = 'input window, operand 2']
    #allocation9 [shape = 's32[2]{0}', space=sflag, size = 0x8, scoped, tag = 'scoped memory for tpu_custom_call.1']
    #allocation10 [shape = 'u8[65536]{0}', space=vmem, size = 0x10000, scoped, tag = 'output window, operand 0']
    #allocation11 [shape = 'u8[8192]{0}', space=vmem, size = 0x2000, scoped, tag = 'output window, operand 1']
    #allocation12 [shape = 's32[2]{0}', space=sflag, size = 0x8, scoped, tag = 'scoped memory for tpu_custom_call.1']
    %11 = vsyncpa [#allocation6], 0
    %s12 = scalar_lea.sflag [#allocation6], 1
    %13 = vsyncpa %s12, 0
    %14 = vsyncpa [#allocation9], 0
    %s15 = scalar_lea.sflag [#allocation9], 1
    %16 = vsyncpa %s15, 0
    %17 = vsyncpa [#allocation7], 0
    %s18 = scalar_lea.sflag [#allocation7], 1
    %19 = vsyncpa %s18, 0
    %20 = vsyncpa [#allocation12], 0
    %s21 = scalar_lea.sflag [#allocation12], 1
    %22 = vsyncpa %s21, 0
    loop: start=0, step=1, limit=6
    $region2: #{tpu_custom_call.1} parent=1 // loop_pre_header
      _
    $region3: #{tpu_custom_call.1} parent=1 // loop_header
      %s24 = sphi 0, %s28
      %p25 = scmp.ge.s32.totalorder %s24, 6
      %s31 = sphi 0, %s43
      %s32 = sphi 0, %s39
      %s33 = sphi 0, %s31
      %s34 = sphi 0, %s32
      %s35 = sphi 0, %s33
      %s36 = sphi 0, %s34
      %s54 = sphi 0, %s56
      %s57 = sphi 0, %s54
      %s58 = sphi 0, %s57
      %s74 = sphi 0, %s58
      %s80 = sphi 0, %s82
      %s83 = sphi 0, %s80
      %s84 = sphi 0, %s83
      %s100 = sphi 0, %s84
      %s106 = sphi 0, %s108
      %s109 = sphi 0, %s106
      %s110 = sphi 0, %s109
      %s126 = sphi 0, %s110
      %s132 = sphi 0, %s134
      %s135 = sphi 0, %s132
      %s136 = sphi 0, %s135
      %s152 = sphi 0, %s136
      %s168 = sphi 0, %s170
      %s171 = sphi 0, %s168
      %s172 = sphi 0, %s171
      %s188 = sphi 0, %s172
      %s194 = sphi 0, %s196
      %s197 = sphi 0, %s194
      %s198 = sphi 0, %s197
      %s214 = sphi 0, %s198
    $region4: #{tpu_custom_call.1} parent=1 // loop_header_branch
      %27 = sbr.rel (%p25) target = $region8
    $region5: #{tpu_custom_call.1} parent=1 // loop_body
      %s29 = ssub.s32 %s24, 1
      %s30 = ssub.s32 %s24, 2
      %s37 = sadd.s32 1, %s32
      %p38 = scmp.ge.s32.totalorder %s37, 2
      %s39 = scalar_select %p38, 0, %s37
      %s40 = sadd.s32 1, %s31
      %s41 = scalar_select %p38, %s40, %s31
      %p42 = scmp.ge.s32.totalorder %s41, 2
      %s43 = scalar_select %p42, 0, %s41
      %s44 = smul.u32 %s32, 2
      %s45 = ssub.s32 1, %s44
      %s46 = smul.u32 %s31, %s45
      %s47 = sadd.s32 %s32, %s46
      %s48 = smul.u32 %s39, 2
      %s49 = ssub.s32 1, %s48
      %s50 = smul.u32 %s43, %s49
      %s51 = sadd.s32 %s39, %s50
      %s52 = ssub.s32 %s47, %s51
      %p53 = scmp.eq.s32.totalorder %s52, 0
      %s55 = sadd.s32 %s54, 1
      %s56 = scalar_select %p53, %s54, %s55
      %p59 = pneg %p53
      %p60 = scmp.eq.s32.totalorder %s24, 3
      %p61 = por %p59, %p60
      %p62 = scmp.ne.s32.totalorder %s54, %s57
      %p63 = scmp.eq.s32.totalorder %s24, 0
      %p64 = por %p62, %p63
      %p65 = scmp.ne.s32.totalorder %s54, %s57
      %p66 = scmp.eq.s32.totalorder %s29, 3
      %p67 = por %p65, %p66
      %p68 = scmp.ne.s32.totalorder %s57, %s58
      %p69 = scmp.eq.s32.totalorder %s29, 0
      %p70 = por %p68, %p69
      %p71 = scmp.ne.s32.totalorder %s57, %s58
      %p72 = scmp.eq.s32.totalorder %s30, 3
      %p73 = por %p71, %p72
      %p75 = scmp.ne.s32.totalorder %s58, %s74
      %p76 = scmp.eq.s32.totalorder %s30, 0
      %p77 = por %p75, %p76
      %s78 = ssub.s32 %s31, %s43
      %p79 = scmp.eq.s32.totalorder %s78, 0
      %s81 = sadd.s32 %s80, 1
      %s82 = scalar_select %p79, %s80, %s81
      %p85 = pneg %p79
      %p86 = scmp.eq.s32.totalorder %s24, 3
      %p87 = por %p85, %p86
      %p88 = scmp.ne.s32.totalorder %s80, %s83
      %p89 = scmp.eq.s32.totalorder %s24, 0
      %p90 = por %p88, %p89
      %p91 = scmp.ne.s32.totalorder %s80, %s83
      %p92 = scmp.eq.s32.totalorder %s29, 3
      %p93 = por %p91, %p92
      %p94 = scmp.ne.s32.totalorder %s83, %s84
      %p95 = scmp.eq.s32.totalorder %s29, 0
      %p96 = por %p94, %p95
      %p97 = scmp.ne.s32.totalorder %s83, %s84
      %p98 = scmp.eq.s32.totalorder %s30, 3
      %p99 = por %p97, %p98
      %p101 = scmp.ne.s32.totalorder %s84, %s100
      %p102 = scmp.eq.s32.totalorder %s30, 0
      %p103 = por %p101, %p102
      %s104 = ssub.s32 %s31, %s43
      %p105 = scmp.eq.s32.totalorder %s104, 0
      %s107 = sadd.s32 %s106, 1
      %s108 = scalar_select %p105, %s106, %s107
      %p111 = pneg %p105
      %p112 = scmp.eq.s32.totalorder %s24, 3
      %p113 = por %p111, %p112
      %p114 = scmp.ne.s32.totalorder %s106, %s109
      %p115 = scmp.eq.s32.totalorder %s24, 0
      %p116 = por %p114, %p115
      %p117 = scmp.ne.s32.totalorder %s106, %s109
      %p118 = scmp.eq.s32.totalorder %s29, 3
      %p119 = por %p117, %p118
      %p120 = scmp.ne.s32.totalorder %s109, %s110
      %p121 = scmp.eq.s32.totalorder %s29, 0
      %p122 = por %p120, %p121
      %p123 = scmp.ne.s32.totalorder %s109, %s110
      %p124 = scmp.eq.s32.totalorder %s30, 3
      %p125 = por %p123, %p124
      %p127 = scmp.ne.s32.totalorder %s110, %s126
      %p128 = scmp.eq.s32.totalorder %s30, 0
      %p129 = por %p127, %p128
      %s130 = ssub.s32 %s31, %s43
      %p131 = scmp.eq.s32.totalorder %s130, 0
      %s133 = sadd.s32 %s132, 1
      %s134 = scalar_select %p131, %s132, %s133
      %p137 = pneg %p131
      %p138 = scmp.eq.s32.totalorder %s24, 3
      %p139 = por %p137, %p138
      %p140 = scmp.ne.s32.totalorder %s132, %s135
      %p141 = scmp.eq.s32.totalorder %s24, 0
      %p142 = por %p140, %p141
      %p143 = scmp.ne.s32.totalorder %s132, %s135
      %p144 = scmp.eq.s32.totalorder %s29, 3
      %p145 = por %p143, %p144
      %p146 = scmp.ne.s32.totalorder %s135, %s136
      %p147 = scmp.eq.s32.totalorder %s29, 0
      %p148 = por %p146, %p147
      %p149 = scmp.ne.s32.totalorder %s135, %s136
      %p150 = scmp.eq.s32.totalorder %s30, 3
      %p151 = por %p149, %p150
      %p153 = scmp.ne.s32.totalorder %s136, %s152
      %p154 = scmp.eq.s32.totalorder %s30, 0
      %p155 = por %p153, %p154
      %s156 = smul.u32 %s32, 2
      %s157 = ssub.s32 1, %s156
      %s158 = smul.u32 %s31, %s157
      %s159 = sadd.s32 %s32, %s158
      %s160 = smul.u32 %s39, 2
      %s161 = ssub.s32 1, %s160
      %s162 = smul.u32 %s43, %s161
      %s163 = sadd.s32 %s39, %s162
      %s164 = ssub.s32 %s159, %s163
      %s165 = ssub.s32 %s31, %s43
      %s166 = sor.u32 %s164, %s165
      %p167 = scmp.eq.s32.totalorder %s166, 0
      %s169 = sadd.s32 %s168, 1
      %s170 = scalar_select %p167, %s168, %s169
      %p173 = pneg %p167
      %p174 = scmp.eq.s32.totalorder %s24, 3
      %p175 = por %p173, %p174
      %p176 = scmp.ne.s32.totalorder %s168, %s171
      %p177 = scmp.eq.s32.totalorder %s24, 0
      %p178 = por %p176, %p177
      %p179 = scmp.ne.s32.totalorder %s168, %s171
      %p180 = scmp.eq.s32.totalorder %s29, 3
      %p181 = por %p179, %p180
      %p182 = scmp.ne.s32.totalorder %s171, %s172
      %p183 = scmp.eq.s32.totalorder %s29, 0
      %p184 = por %p182, %p183
      %p185 = scmp.ne.s32.totalorder %s171, %s172
      %p186 = scmp.eq.s32.totalorder %s30, 3
      %p187 = por %p185, %p186
      %p189 = scmp.ne.s32.totalorder %s172, %s188
      %p190 = scmp.eq.s32.totalorder %s30, 0
      %p191 = por %p189, %p190
      %s192 = ssub.s32 %s31, %s43
      %p193 = scmp.eq.s32.totalorder %s192, 0
      %s195 = sadd.s32 %s194, 1
      %s196 = scalar_select %p193, %s194, %s195
      %p199 = pneg %p193
      %p200 = scmp.eq.s32.totalorder %s24, 3
      %p201 = por %p199, %p200
      %p202 = scmp.ne.s32.totalorder %s194, %s197
      %p203 = scmp.eq.s32.totalorder %s24, 0
      %p204 = por %p202, %p203
      %p205 = scmp.ne.s32.totalorder %s194, %s197
      %p206 = scmp.eq.s32.totalorder %s29, 3
      %p207 = por %p205, %p206
      %p208 = scmp.ne.s32.totalorder %s197, %s198
      %p209 = scmp.eq.s32.totalorder %s29, 0
      %p210 = por %p208, %p209
      %p211 = scmp.ne.s32.totalorder %s197, %s198
      %p212 = scmp.eq.s32.totalorder %s30, 3
      %p213 = por %p211, %p212
      %p215 = scmp.ne.s32.totalorder %s198, %s214
      %p216 = scmp.eq.s32.totalorder %s30, 0
      %p217 = por %p215, %p216
      %p218 = scmp.le.s32.totalorder 1, %s24
      %p219 = scmp.lt.s32.totalorder %s24, 5
      %p220 = pnand %p218, %p219
      %p221 = pneg %p220
      // Predicated region
      $region9: #{tpu_custom_call.1} parent=5 // pred_check
        _
      $region10: #{tpu_custom_call.1} parent=5 // pred_check_branch
        %223 = sbr.rel (%p220) target = $region12
      $region11: #{tpu_custom_call.1} parent=5 // pred_region
        %s224 = ssub.s32 %s24, 1
      $region12: #{tpu_custom_call.1} parent=5 // pred_fallthru
        _
      %p225 = scmp.lt.s32.totalorder %s24, 4
      // Predicated region
      $region13: #{tpu_custom_call.1} parent=5 // pred_check
        %p226 = pneg %p225
      $region14: #{tpu_custom_call.1} parent=5 // pred_check_branch
        %228 = sbr.rel (%p226) target = $region16
      $region15: #{tpu_custom_call.1} parent=5 // pred_region
        // Predicated region
        $region17: #{tpu_custom_call.1} parent=15 // pred_check
          %p229 = pneg %p64
        $region18: #{tpu_custom_call.1} parent=15 // pred_check_branch
          %231 = sbr.rel (%p229) target = $region20
        $region19: #{tpu_custom_call.1} parent=15 // pred_region
          %s232 = smul.u32 %s32, 2
          %s233 = ssub.s32 1, %s232
          %s234 = smul.u32 %s31, %s233
          %s235 = sadd.s32 %s32, %s234
          %s236 = smul.u32 8, %s235
          %p237 = scmp.lt.s32.totalorder %s236, 15
          %s238 = scalar_select %p237, %s236, 15
          %s239 = smul.addr %s238, 8
          %s240 = scalar_lea.vmem %s0, %s239
          %s241 = smul.u32 %s32, 2
          %s242 = ssub.s32 1, %s241
          %s243 = smul.u32 %s31, %s242
          %s244 = sadd.s32 %s32, %s243
          %s245 = smul.u32 8, %s244
        $region20: #{tpu_custom_call.1} parent=15 // pred_fallthru
          _
        // Predicated region
        $region21: #{tpu_custom_call.1} parent=15 // pred_check
          %p246 = pneg %p90
        $region22: #{tpu_custom_call.1} parent=15 // pred_check_branch
          %248 = sbr.rel (%p246) target = $region24
        $region23: #{tpu_custom_call.1} parent=15 // pred_region
          %s249 = sand.u32 %s80, 1
          %s250 = scalar_lea.sflag [#allocation6], %s249
          %s251 = sand.u32 %s80, 1
          %s252 = smul.addr %s251, 256
          %s253 = scalar_lea.vmem [#allocation5], %s252
          %s255 = ssub.s32 4096, 4096
          %256 = vsyncadd %s250, %s255
          %s257 = smul.addr %s31, 32
          %s258 = smul.addr %s257, 128
          %s259 = scalar_lea.hbm %s1, %s258
          %s260 = sshll.u32 %s253, 4
          %s261 = int_to_ptr.vmem [resolvable:$true] %s260
          %266 = dma.hbm_to_vmem [thread:$0]  %s259, 4096, %s261, %s250, 512, 512, 32
        $region24: #{tpu_custom_call.1} parent=15 // pred_fallthru
          _
        // Predicated region
        $region25: #{tpu_custom_call.1} parent=15 // pred_check
          %p267 = pneg %p116
        $region26: #{tpu_custom_call.1} parent=15 // pred_check_branch
          %269 = sbr.rel (%p267) target = $region28
        $region27: #{tpu_custom_call.1} parent=15 // pred_region
          %s270 = sand.u32 %s106, 1
          %s271 = scalar_lea.sflag [#allocation9], %s270
          %s272 = sand.u32 %s106, 1
          %s273 = smul.addr %s272, 512
          %s274 = scalar_lea.vmem [#allocation8], %s273
          %s276 = ssub.s32 8192, 8192
          %277 = vsyncadd %s271, %s276
          %s278 = smul.addr %s31, 64
          %s279 = smul.addr %s278, 128
          %s280 = scalar_lea.hbm %s2, %s279
          %s281 = sshll.u32 %s274, 4
          %s282 = int_to_ptr.vmem [resolvable:$true] %s281
          %287 = dma.hbm_to_vmem [thread:$0]  %s280, 8192, %s282, %s271, 512, 512, 32
        $region28: #{tpu_custom_call.1} parent=15 // pred_fallthru
          _
        // Predicated region
        $region29: #{tpu_custom_call.1} parent=15 // pred_check
          %p288 = pneg %p142
        $region30: #{tpu_custom_call.1} parent=15 // pred_check_branch
          %290 = sbr.rel (%p288) target = $region32
        $region31: #{tpu_custom_call.1} parent=15 // pred_region
          %p291 = scmp.lt.s32.totalorder %s31, 1
          %s292 = scalar_select %p291, %s31, 1
          %s293 = smul.addr %s292, 4
          %s294 = scalar_lea.vmem %s3, %s293
        $region32: #{tpu_custom_call.1} parent=15 // pred_fallthru
          _
      $region16: #{tpu_custom_call.1} parent=5 // pred_fallthru
        _
      %p295 = scmp.le.s32.totalorder 1, %s24
      %p296 = scmp.lt.s32.totalorder %s24, 5
      %p297 = pnand %p295, %p296
      %p298 = pneg %p297
      // Predicated region
      $region33: #{tpu_custom_call.1} parent=5 // pred_check
        _
      $region34: #{tpu_custom_call.1} parent=5 // pred_check_branch
        %300 = sbr.rel (%p297) target = $region36
      $region35: #{tpu_custom_call.1} parent=5 // pred_region
        %s301 = ssub.s32 %s24, 1
        %s302 = sand.u32 %s83, 1
        %s303 = scalar_lea.sflag [#allocation6], %s302
        %s304 = sand.u32 %s83, 1
        %s305 = smul.addr %s304, 256
        %s306 = scalar_lea.vmem [#allocation5], %s305
        // Predicated region
        $region37: #{tpu_custom_call.1} parent=35 // pred_check
          %p307 = pneg %p96
        $region38: #{tpu_custom_call.1} parent=35 // pred_check_branch
          %309 = sbr.rel (%p307) target = $region40
        $region39: #{tpu_custom_call.1} parent=35 // pred_region
          %310 = dma.done %s303, 4096
        $region40: #{tpu_custom_call.1} parent=35 // pred_fallthru
          _
        %s311 = sand.u32 %s109, 1
        %s312 = scalar_lea.sflag [#allocation9], %s311
        %s313 = sand.u32 %s109, 1
        %s314 = smul.addr %s313, 512
        %s315 = scalar_lea.vmem [#allocation8], %s314
        // Predicated region
        $region41: #{tpu_custom_call.1} parent=35 // pred_check
          %p316 = pneg %p122
        $region42: #{tpu_custom_call.1} parent=35 // pred_check_branch
          %318 = sbr.rel (%p316) target = $region44
        $region43: #{tpu_custom_call.1} parent=35 // pred_region
          %319 = dma.done %s312, 8192
        $region44: #{tpu_custom_call.1} parent=35 // pred_fallthru
          _
        %s320 = smul.u32 %s34, 2
        %s321 = ssub.s32 1, %s320
        %s322 = smul.u32 %s33, %s321
        %s323 = sadd.s32 %s34, %s322
        %s324 = smul.u32 8, %s323
        %p325 = scmp.lt.s32.totalorder %s324, 15
        %s326 = scalar_select %p325, %s324, 15
        %s327 = smul.addr %s326, 8
        %s328 = scalar_lea.vmem %s0, %s327
        %p329 = pneg %p70
        %p330 = pneg %p67
        %s331 = sand.u32 %s83, 1
        %s332 = scalar_lea.sflag [#allocation6], %s331
        %s333 = sand.u32 %s83, 1
        %s334 = smul.addr %s333, 256
        %s335 = scalar_lea.vmem [#allocation5], %s334
        %p336 = pneg %p96
        %p337 = pneg %p93
        %s338 = sand.u32 %s109, 1
        %s339 = scalar_lea.sflag [#allocation9], %s338
        %s340 = sand.u32 %s109, 1
        %s341 = smul.addr %s340, 512
        %s342 = scalar_lea.vmem [#allocation8], %s341
        %p343 = pneg %p122
        %p344 = pneg %p119
        %p345 = scmp.lt.s32.totalorder %s33, 1
        %s346 = scalar_select %p345, %s33, 1
        %s347 = smul.addr %s346, 4
        %s348 = scalar_lea.vmem %s3, %s347
        %p349 = pneg %p148
        %p350 = pneg %p145
        %p351 = pneg %p184
        %p352 = pneg %p181
        %s353 = sand.u32 %s171, 1
        %s354 = scalar_lea.sflag [#allocation7], %s353
        %s355 = sand.u32 %s171, 1
        %s356 = smul.addr %s355, 64
        %s357 = scalar_lea.vmem [#allocation10], %s356
        %p358 = pneg %p210
        %p359 = pneg %p207
        %s360 = sand.u32 %s197, 1
        %s361 = scalar_lea.sflag [#allocation12], %s360
        %s362 = sand.u32 %s197, 1
        %s363 = smul.addr %s362, 8
        %s364 = scalar_lea.vmem [#allocation11], %s363
        %s365 = smul.u32 %s34, 2
        %s366 = ssub.s32 1, %s365
        %s367 = smul.u32 %s33, %s366
        %s368 = sadd.s32 %s34, %s367
        %s369 = smul.u32 8, %s368
        %p370 = scmp.lt.s32.totalorder %s369, 15
        %s371 = scalar_select %p370, %s369, 15
        %s372 = smul.addr %s371, 8
        %s373 = scalar_lea.vmem %s0, %s372
        %s374 = smul.u32 %s34, 2
        %s375 = ssub.s32 1, %s374
        %s376 = smul.u32 %s33, %s375
        %s377 = sadd.s32 %s34, %s376
        %s378 = smul.u32 8, %s377
        %p379 = scmp.lt.s32.totalorder %s33, 1
        %s380 = scalar_select %p379, %s33, 1
        %s381 = smul.addr %s380, 4
        %s382 = scalar_lea.vmem %s3, %s381
        %s383 = smul.u32 %s34, 2
        %s384 = ssub.s32 1, %s383
        %s385 = smul.u32 %s33, %s384
        %s386 = sadd.s32 %s34, %s385
        %s387 = smul.u32 8, %s386
        %p388 = scmp.eq.s32.totalorder %s34, 0
        // Predicated region
        $region45: #{tpu_custom_call.1} parent=35 // pred_check
          %p389 = pneg %p388
        $region46: #{tpu_custom_call.1} parent=35 // pred_check_branch
          %391 = sbr.rel (%p389) target = $region48
        $region47: #{tpu_custom_call.1} parent=35 // pred_region
          %392 = vst [vmem:[#allocation2] sm:$0xff] 0.0
          %393 = vst [vmem:[#allocation3] sm:$0xff] 0.0
        $region48: #{tpu_custom_call.1} parent=35 // pred_fallthru
          _
        %v394 = vld [vmem:[%s373] sm:$0xff]
        %v395 = vld [vmem:[%s373 + $0x8] sm:$0xff]
        %v396 = vld [vmem:[%s373 + $0x10] sm:$0xff]
        %v397 = vld [vmem:[%s373 + $0x18] sm:$0xff]
        %v398 = vld [vmem:[%s373 + $0x20] sm:$0xff]
        %v399 = vld [vmem:[%s373 + $0x28] sm:$0xff]
        %v400 = vld [vmem:[%s373 + $0x30] sm:$0xff]
        %v401 = vld [vmem:[%s373 + $0x38] sm:$0xff]
        %v402 = vld [vmem:[%s306] sm:$0xff]
        %v403 = vld [vmem:[%s306 + $0x8] sm:$0xff]
        %v404 = vld [vmem:[%s306 + $0x10] sm:$0xff]
        %v405 = vld [vmem:[%s306 + $0x18] sm:$0xff]
        %v406 = vld [vmem:[%s306 + $0x20] sm:$0xff]
        %v407 = vld [vmem:[%s306 + $0x28] sm:$0xff]
        %v408 = vld [vmem:[%s306 + $0x30] sm:$0xff]
        %v409 = vld [vmem:[%s306 + $0x38] sm:$0xff]
        %v410 = vld [vmem:[%s306 + $0x40] sm:$0xff]
        %v411 = vld [vmem:[%s306 + $0x48] sm:$0xff]
        %v412 = vld [vmem:[%s306 + $0x50] sm:$0xff]
        %v413 = vld [vmem:[%s306 + $0x58] sm:$0xff]
        %v414 = vld [vmem:[%s306 + $0x60] sm:$0xff]
        %v415 = vld [vmem:[%s306 + $0x68] sm:$0xff]
        %v416 = vld [vmem:[%s306 + $0x70] sm:$0xff]
        %v417 = vld [vmem:[%s306 + $0x78] sm:$0xff]
        %v418 = vld [vmem:[%s306 + $0x80] sm:$0xff]
        %v419 = vld [vmem:[%s306 + $0x88] sm:$0xff]
        %v420 = vld [vmem:[%s306 + $0x90] sm:$0xff]
        %v421 = vld [vmem:[%s306 + $0x98] sm:$0xff]
        %v422 = vld [vmem:[%s306 + $0xa0] sm:$0xff]
        %v423 = vld [vmem:[%s306 + $0xa8] sm:$0xff]
        %v424 = vld [vmem:[%s306 + $0xb0] sm:$0xff]
        %v425 = vld [vmem:[%s306 + $0xb8] sm:$0xff]
        %v426 = vld [vmem:[%s306 + $0xc0] sm:$0xff]
        %v427 = vld [vmem:[%s306 + $0xc8] sm:$0xff]
        %v428 = vld [vmem:[%s306 + $0xd0] sm:$0xff]
        %v429 = vld [vmem:[%s306 + $0xd8] sm:$0xff]
        %v430 = vld [vmem:[%s306 + $0xe0] sm:$0xff]
        %v431 = vld [vmem:[%s306 + $0xe8] sm:$0xff]
        %v432 = vld [vmem:[%s306 + $0xf0] sm:$0xff]
        %v433 = vld [vmem:[%s306 + $0xf8] sm:$0xff]
        %v434 = vld [vmem:[%s382] sm:$0xf]
        %v436 = vlaneseq
        %v437 = vshrl.u32 %v436, 7
        %v438 = vsub.s32 0, %v437
        %v439 = vrot.slane %v434, %v438
        %v440 = vlaneseq
        %v441 = vshrl.u32 %v440, 7
        %v442 = vsub.s32 1, %v441
        %v443 = vrot.slane %v434, %v442
        %v444 = vlaneseq
        %v445 = vshrl.u32 %v444, 7
        %v446 = vsub.s32 2, %v445
        %v447 = vrot.slane %v434, %v446
        %v448 = vlaneseq
        %v449 = vshrl.u32 %v448, 7
        %v450 = vsub.s32 3, %v449
        %v451 = vrot.slane %v434, %v450
        %vm456 = vcmask 523264
        %v458 = vsel %vm456, %v394, 0
        %v461 = vsel %vm456, %v395, 0
        %v464 = vsel %vm456, %v396, 0
        %v467 = vsel %vm456, %v397, 0
        %v470 = vsel %vm456, %v398, 0
        %v473 = vsel %vm456, %v399, 0
        %v476 = vsel %vm456, %v400, 0
        %v479 = vsel %vm456, %v401, 0
        %481 = vmatprep.subr.mxu0 %v403
        %482 = vmatpush1.msra.mxu0 %v402
        %483 = vmatprep.subr.mxu0 %v407
        %484 = vmatpush1.msra.mxu0 %v406
        %485 = vmatprep.subr.mxu0 %v411
        %486 = vmatpush1.msra.mxu0 %v410
        %487 = vmatprep.subr.mxu0 %v415
        %488 = vmatpush1.msra.mxu0 %v414
        %489 = vmatprep.subr.mxu0 %v419
        %490 = vmatpush1.msra.mxu0 %v418
        %491 = vmatprep.subr.mxu0 %v423
        %492 = vmatpush1.msra.mxu0 %v422
        %493 = vmatprep.subr.mxu0 %v427
        %494 = vmatpush1.msra.mxu0 %v426
        %495 = vmatprep.subr.mxu0 %v431
        %496 = vmatpush1.msra.mxu0 %v430
        %497 = vmatprep.subr.mxu0 0.0
        %498 = vmatpush1.msra.mxu0 0.0
        %499 = vmatprep.subr.mxu0 0.0
        %500 = vmatpush1.msra.mxu0 0.0
        %501 = vmatprep.subr.mxu0 0.0
        %502 = vmatpush1.msra.mxu0 0.0
        %503 = vmatprep.subr.mxu0 0.0
        %504 = vmatpush1.msra.mxu0 0.0
        %505 = vmatprep.subr.mxu0 0.0
        %506 = vmatpush1.msra.mxu0 0.0
        %507 = vmatprep.subr.mxu0 0.0
        %508 = vmatpush1.msra.mxu0 0.0
        %509 = vmatprep.subr.mxu0 0.0
        %510 = vmatpush1.msra.mxu0 0.0
        %511 = vmatprep.subr.mxu0 0.0
        %512 = vmatpush1.msra.mxu0 0.0
        %513 = vmatprep.subr.mxu0 0.0
        %514 = vmatpush1.msra.mxu0 0.0
        %515 = vmatprep.subr.mxu0 0.0
        %516 = vmatpush1.msra.mxu0 0.0
        %517 = vmatprep.subr.mxu0 0.0
        %518 = vmatpush1.msra.mxu0 0.0
        %519 = vmatprep.subr.mxu0 0.0
        %520 = vmatpush1.msra.mxu0 0.0
        %521 = vmatprep.subr.mxu0 0.0
        %522 = vmatpush1.msra.mxu0 0.0
        %523 = vmatprep.subr.mxu0 0.0
        %524 = vmatpush1.msra.mxu0 0.0
        %525 = vmatprep.subr.mxu0 0.0
        %526 = vmatpush1.msra.mxu0 0.0
        %527 = vmatprep.subr.mxu0 0.0
        %528 = vmatpush1.msra.mxu0 0.0
        %529 = vmatprep.subr.mxu0 0.0
        %530 = vmatpush1.msra.mxu0 0.0
        %531 = vmatprep.subr.mxu0 0.0
        %532 = vmatpush1.msra.mxu0 0.0
        %533 = vmatprep.subr.mxu0 0.0
        %534 = vmatpush1.msra.mxu0 0.0
        %535 = vmatprep.subr.mxu0 0.0
        %536 = vmatpush1.msra.mxu0 0.0
        %537 = vmatprep.subr.mxu0 0.0
        %538 = vmatpush1.msra.mxu0 0.0
        %539 = vmatprep.subr.mxu0 0.0
        %540 = vmatpush1.msra.mxu0 0.0
        %541 = vmatprep.subr.mxu0 0.0
        %542 = vmatpush1.msra.mxu0 0.0
        %543 = vmatprep.subr.mxu0 0.0
        %544 = vmatpush1.msra.mxu0 0.0
        %545 = vmatprep.mubr.f32.mxu0 0.0
        %546 = vmatmul.mubr.f32.gmra.mrb[0].mxu0 %v458
        %v547 = vpop.f32.mrb[0].mxu0
        %v548 = vadd.f32 %v439, %v547
        %v549 = vpop.f32.mrb[0].mxu0
        %v550 = vadd.f32 %v443, %v549
        %551 = vmatprep.mubr.f32.mxu0 0.0
        %552 = vmatmul.mubr.f32.gmra.mrb[0].mxu0 %v461
        %v553 = vpop.f32.mrb[0].mxu0
        %v554 = vadd.f32 %v439, %v553
        %v555 = vpop.f32.mrb[0].mxu0
        %v556 = vadd.f32 %v443, %v555
        %557 = vmatprep.mubr.f32.mxu0 0.0
        %558 = vmatmul.mubr.f32.gmra.mrb[0].mxu0 %v464
        %v559 = vpop.f32.mrb[0].mxu0
        %v560 = vadd.f32 %v439, %v559
        %v561 = vpop.f32.mrb[0].mxu0
        %v562 = vadd.f32 %v443, %v561
        %563 = vmatprep.mubr.f32.mxu0 0.0
        %564 = vmatmul.mubr.f32.gmra.mrb[0].mxu0 %v467
        %v565 = vpop.f32.mrb[0].mxu0
        %v566 = vadd.f32 %v439, %v565
        %v567 = vpop.f32.mrb[0].mxu0
        %v568 = vadd.f32 %v443, %v567
        %569 = vmatprep.mubr.f32.mxu0 0.0
        %570 = vmatmul.mubr.f32.gmra.mrb[0].mxu0 %v470
        %v571 = vpop.f32.mrb[0].mxu0
        %v572 = vadd.f32 %v439, %v571
        %v573 = vpop.f32.mrb[0].mxu0
        %v574 = vadd.f32 %v443, %v573
        %575 = vmatprep.mubr.f32.mxu0 0.0
        %576 = vmatmul.mubr.f32.gmra.mrb[0].mxu0 %v473
        %v577 = vpop.f32.mrb[0].mxu0
        %v578 = vadd.f32 %v439, %v577
        %v579 = vpop.f32.mrb[0].mxu0
        %v580 = vadd.f32 %v443, %v579
        %581 = vmatprep.mubr.f32.mxu0 0.0
        %582 = vmatmul.mubr.f32.gmra.mrb[0].mxu0 %v476
        %v583 = vpop.f32.mrb[0].mxu0
        %v584 = vadd.f32 %v439, %v583
        %v585 = vpop.f32.mrb[0].mxu0
        %v586 = vadd.f32 %v443, %v585
        %587 = vmatprep.mubr.f32.mxu0 0.0
        %588 = vmatmul.mubr.f32.gmra.mrb[0].mxu0 %v479
        %v589 = vpop.f32.mrb[0].mxu0
        %v590 = vadd.f32 %v439, %v589
        %v591 = vpop.f32.mrb[0].mxu0
        %v592 = vadd.f32 %v443, %v591
        %593 = vdwg.mxu0
        %594 = vmatprep.subr.mxu0 %v405
        %595 = vmatpush1.msra.mxu0 %v404
        %596 = vmatprep.subr.mxu0 %v409
        %597 = vmatpush1.msra.mxu0 %v408
        %598 = vmatprep.subr.mxu0 %v413
        %599 = vmatpush1.msra.mxu0 %v412
        %600 = vmatprep.subr.mxu0 %v417
        %601 = vmatpush1.msra.mxu0 %v416
        %602 = vmatprep.subr.mxu0 %v421
        %603 = vmatpush1.msra.mxu0 %v420
        %604 = vmatprep.subr.mxu0 %v425
        %605 = vmatpush1.msra.mxu0 %v424
        %606 = vmatprep.subr.mxu0 %v429
        %607 = vmatpush1.msra.mxu0 %v428
        %608 = vmatprep.subr.mxu0 %v433
        %609 = vmatpush1.msra.mxu0 %v432
        %610 = vmatprep.subr.mxu0 0.0
        %611 = vmatpush1.msra.mxu0 0.0
        %612 = vmatprep.subr.mxu0 0.0
        %613 = vmatpush1.msra.mxu0 0.0
        %614 = vmatprep.subr.mxu0 0.0
        %615 = vmatpush1.msra.mxu0 0.0
        %616 = vmatprep.subr.mxu0 0.0
        %617 = vmatpush1.msra.mxu0 0.0
        %618 = vmatprep.subr.mxu0 0.0
        %619 = vmatpush1.msra.mxu0 0.0
        %620 = vmatprep.subr.mxu0 0.0
        %621 = vmatpush1.msra.mxu0 0.0
        %622 = vmatprep.subr.mxu0 0.0
        %623 = vmatpush1.msra.mxu0 0.0
        %624 = vmatprep.subr.mxu0 0.0
        %625 = vmatpush1.msra.mxu0 0.0
        %626 = vmatprep.subr.mxu0 0.0
        %627 = vmatpush1.msra.mxu0 0.0
        %628 = vmatprep.subr.mxu0 0.0
        %629 = vmatpush1.msra.mxu0 0.0
        %630 = vmatprep.subr.mxu0 0.0
        %631 = vmatpush1.msra.mxu0 0.0
        %632 = vmatprep.subr.mxu0 0.0
        %633 = vmatpush1.msra.mxu0 0.0
        %634 = vmatprep.subr.mxu0 0.0
        %635 = vmatpush1.msra.mxu0 0.0
        %636 = vmatprep.subr.mxu0 0.0
        %637 = vmatpush1.msra.mxu0 0.0
        %638 = vmatprep.subr.mxu0 0.0
        %639 = vmatpush1.msra.mxu0 0.0
        %640 = vmatprep.subr.mxu0 0.0
        %641 = vmatpush1.msra.mxu0 0.0
        %642 = vmatprep.subr.mxu0 0.0
        %643 = vmatpush1.msra.mxu0 0.0
        %644 = vmatprep.subr.mxu0 0.0
        %645 = vmatpush1.msra.mxu0 0.0
        %646 = vmatprep.subr.mxu0 0.0
        %647 = vmatpush1.msra.mxu0 0.0
        %648 = vmatprep.subr.mxu0 0.0
        %649 = vmatpush1.msra.mxu0 0.0
        %650 = vmatprep.subr.mxu0 0.0
        %651 = vmatpush1.msra.mxu0 0.0
        %652 = vmatprep.subr.mxu0 0.0
        %653 = vmatpush1.msra.mxu0 0.0
        %654 = vmatprep.subr.mxu0 0.0
        %655 = vmatpush1.msra.mxu0 0.0
        %656 = vmatprep.subr.mxu0 0.0
        %657 = vmatpush1.msra.mxu0 0.0
        %658 = vmatprep.mubr.f32.mxu0 0.0
        %659 = vmatmul.mubr.f32.gmra.mrb[0].mxu0 %v458
        %v660 = vpop.f32.mrb[0].mxu0
        %v661 = vadd.f32 %v447, %v660
        %v662 = vpop.f32.mrb[0].mxu0
        %v663 = vadd.f32 %v451, %v662
        %664 = vmatprep.mubr.f32.mxu0 0.0
        %665 = vmatmul.mubr.f32.gmra.mrb[0].mxu0 %v461
        %v666 = vpop.f32.mrb[0].mxu0
        %v667 = vadd.f32 %v447, %v666
        %v668 = vpop.f32.mrb[0].mxu0
        %v669 = vadd.f32 %v451, %v668
        %670 = vmatprep.mubr.f32.mxu0 0.0
        %671 = vmatmul.mubr.f32.gmra.mrb[0].mxu0 %v464
        %v672 = vpop.f32.mrb[0].mxu0
        %v673 = vadd.f32 %v447, %v672
        %v674 = vpop.f32.mrb[0].mxu0
        %v675 = vadd.f32 %v451, %v674
        %676 = vmatprep.mubr.f32.mxu0 0.0
        %677 = vmatmul.mubr.f32.gmra.mrb[0].mxu0 %v467
        %v678 = vpop.f32.mrb[0].mxu0
        %v679 = vadd.f32 %v447, %v678
        %v680 = vpop.f32.mrb[0].mxu0
        %v681 = vadd.f32 %v451, %v680
        %682 = vmatprep.mubr.f32.mxu0 0.0
        %683 = vmatmul.mubr.f32.gmra.mrb[0].mxu0 %v470
        %v684 = vpop.f32.mrb[0].mxu0
        %v685 = vadd.f32 %v447, %v684
        %v686 = vpop.f32.mrb[0].mxu0
        %v687 = vadd.f32 %v451, %v686
        %688 = vmatprep.mubr.f32.mxu0 0.0
        %689 = vmatmul.mubr.f32.gmra.mrb[0].mxu0 %v473
        %v690 = vpop.f32.mrb[0].mxu0
        %v691 = vadd.f32 %v447, %v690
        %v692 = vpop.f32.mrb[0].mxu0
        %v693 = vadd.f32 %v451, %v692
        %694 = vmatprep.mubr.f32.mxu0 0.0
        %695 = vmatmul.mubr.f32.gmra.mrb[0].mxu0 %v476
        %v696 = vpop.f32.mrb[0].mxu0
        %v697 = vadd.f32 %v447, %v696
        %v698 = vpop.f32.mrb[0].mxu0
        %v699 = vadd.f32 %v451, %v698
        %700 = vmatprep.mubr.f32.mxu0 0.0
        %701 = vmatmul.mubr.f32.gmra.mrb[0].mxu0 %v479
        %v702 = vpop.f32.mrb[0].mxu0
        %v703 = vadd.f32 %v447, %v702
        %v704 = vpop.f32.mrb[0].mxu0
        %v705 = vadd.f32 %v451, %v704
        %706 = vdwg.mxu0
        %707 = vst [vmem:[#allocation4] sm:$0xff] %v548
        %708 = vst [vmem:[#allocation4 + $0x8] sm:$0xff] %v550
        %709 = vst [vmem:[#allocation4 + $0x10] sm:$0xff] %v661
        %710 = vst [vmem:[#allocation4 + $0x18] sm:$0xff] %v663
        %711 = vst [vmem:[#allocation4 + $0x20] sm:$0xff] %v554
        %712 = vst [vmem:[#allocation4 + $0x28] sm:$0xff] %v556
        %713 = vst [vmem:[#allocation4 + $0x30] sm:$0xff] %v667
        %714 = vst [vmem:[#allocation4 + $0x38] sm:$0xff] %v669
        %715 = vst [vmem:[#allocation4 + $0x40] sm:$0xff] %v560
        %716 = vst [vmem:[#allocation4 + $0x48] sm:$0xff] %v562
        %717 = vst [vmem:[#allocation4 + $0x50] sm:$0xff] %v673
        %718 = vst [vmem:[#allocation4 + $0x58] sm:$0xff] %v675
        %719 = vst [vmem:[#allocation4 + $0x60] sm:$0xff] %v566
        %720 = vst [vmem:[#allocation4 + $0x68] sm:$0xff] %v568
        %721 = vst [vmem:[#allocation4 + $0x70] sm:$0xff] %v679
        %722 = vst [vmem:[#allocation4 + $0x78] sm:$0xff] %v681
        %723 = vst [vmem:[#allocation4 + $0x80] sm:$0xff] %v572
        %724 = vst [vmem:[#allocation4 + $0x88] sm:$0xff] %v574
        %725 = vst [vmem:[#allocation4 + $0x90] sm:$0xff] %v685
        %726 = vst [vmem:[#allocation4 + $0x98] sm:$0xff] %v687
        %727 = vst [vmem:[#allocation4 + $0xa0] sm:$0xff] %v578
        %728 = vst [vmem:[#allocation4 + $0xa8] sm:$0xff] %v580
        %729 = vst [vmem:[#allocation4 + $0xb0] sm:$0xff] %v691
        %730 = vst [vmem:[#allocation4 + $0xb8] sm:$0xff] %v693
        %731 = vst [vmem:[#allocation4 + $0xc0] sm:$0xff] %v584
        %732 = vst [vmem:[#allocation4 + $0xc8] sm:$0xff] %v586
        %733 = vst [vmem:[#allocation4 + $0xd0] sm:$0xff] %v697
        %734 = vst [vmem:[#allocation4 + $0xd8] sm:$0xff] %v699
        %735 = vst [vmem:[#allocation4 + $0xe0] sm:$0xff] %v590
        %736 = vst [vmem:[#allocation4 + $0xe8] sm:$0xff] %v592
        %737 = vst [vmem:[#allocation4 + $0xf0] sm:$0xff] %v703
        %738 = vst [vmem:[#allocation4 + $0xf8] sm:$0xff] %v705
        %v739 = vld [vmem:[%s315] sm:$0xff]
        %v740 = vld [vmem:[%s315 + $0x8] sm:$0xff]
        %v741 = vld [vmem:[%s315 + $0x10] sm:$0xff]
        %v742 = vld [vmem:[%s315 + $0x18] sm:$0xff]
        %v743 = vld [vmem:[%s315 + $0x20] sm:$0xff]
        %v744 = vld [vmem:[%s315 + $0x28] sm:$0xff]
        %v745 = vld [vmem:[%s315 + $0x30] sm:$0xff]
        %v746 = vld [vmem:[%s315 + $0x38] sm:$0xff]
        %v747 = vld [vmem:[%s315 + $0x40] sm:$0xff]
        %v748 = vld [vmem:[%s315 + $0x48] sm:$0xff]
        %v749 = vld [vmem:[%s315 + $0x50] sm:$0xff]
        %v750 = vld [vmem:[%s315 + $0x58] sm:$0xff]
        %v751 = vld [vmem:[%s315 + $0x60] sm:$0xff]
        %v752 = vld [vmem:[%s315 + $0x68] sm:$0xff]
        %v753 = vld [vmem:[%s315 + $0x70] sm:$0xff]
        %v754 = vld [vmem:[%s315 + $0x78] sm:$0xff]
        %v755 = vld [vmem:[%s315 + $0x80] sm:$0xff]
        %v756 = vld [vmem:[%s315 + $0x88] sm:$0xff]
        %v757 = vld [vmem:[%s315 + $0x90] sm:$0xff]
        %v758 = vld [vmem:[%s315 + $0x98] sm:$0xff]
        %v759 = vld [vmem:[%s315 + $0xa0] sm:$0xff]
        %v760 = vld [vmem:[%s315 + $0xa8] sm:$0xff]
        %v761 = vld [vmem:[%s315 + $0xb0] sm:$0xff]
        %v762 = vld [vmem:[%s315 + $0xb8] sm:$0xff]
        %v763 = vld [vmem:[%s315 + $0xc0] sm:$0xff]
        %v764 = vld [vmem:[%s315 + $0xc8] sm:$0xff]
        %v765 = vld [vmem:[%s315 + $0xd0] sm:$0xff]
        %v766 = vld [vmem:[%s315 + $0xd8] sm:$0xff]
        %v767 = vld [vmem:[%s315 + $0xe0] sm:$0xff]
        %v768 = vld [vmem:[%s315 + $0xe8] sm:$0xff]
        %v769 = vld [vmem:[%s315 + $0xf0] sm:$0xff]
        %v770 = vld [vmem:[%s315 + $0xf8] sm:$0xff]
        %v771 = vld [vmem:[%s315 + $0x100] sm:$0xff]
        %v772 = vld [vmem:[%s315 + $0x108] sm:$0xff]
        %v773 = vld [vmem:[%s315 + $0x110] sm:$0xff]
        %v774 = vld [vmem:[%s315 + $0x118] sm:$0xff]
        %v775 = vld [vmem:[%s315 + $0x120] sm:$0xff]
        %v776 = vld [vmem:[%s315 + $0x128] sm:$0xff]
        %v777 = vld [vmem:[%s315 + $0x130] sm:$0xff]
        %v778 = vld [vmem:[%s315 + $0x138] sm:$0xff]
        %v779 = vld [vmem:[%s315 + $0x140] sm:$0xff]
        %v780 = vld [vmem:[%s315 + $0x148] sm:$0xff]
        %v781 = vld [vmem:[%s315 + $0x150] sm:$0xff]
        %v782 = vld [vmem:[%s315 + $0x158] sm:$0xff]
        %v783 = vld [vmem:[%s315 + $0x160] sm:$0xff]
        %v784 = vld [vmem:[%s315 + $0x168] sm:$0xff]
        %v785 = vld [vmem:[%s315 + $0x170] sm:$0xff]
        %v786 = vld [vmem:[%s315 + $0x178] sm:$0xff]
        %v787 = vld [vmem:[%s315 + $0x180] sm:$0xff]
        %v788 = vld [vmem:[%s315 + $0x188] sm:$0xff]
        %v789 = vld [vmem:[%s315 + $0x190] sm:$0xff]
        %v790 = vld [vmem:[%s315 + $0x198] sm:$0xff]
        %v791 = vld [vmem:[%s315 + $0x1a0] sm:$0xff]
        %v792 = vld [vmem:[%s315 + $0x1a8] sm:$0xff]
        %v793 = vld [vmem:[%s315 + $0x1b0] sm:$0xff]
        %v794 = vld [vmem:[%s315 + $0x1b8] sm:$0xff]
        %v795 = vld [vmem:[%s315 + $0x1c0] sm:$0xff]
        %v796 = vld [vmem:[%s315 + $0x1c8] sm:$0xff]
        %v797 = vld [vmem:[%s315 + $0x1d0] sm:$0xff]
        %v798 = vld [vmem:[%s315 + $0x1d8] sm:$0xff]
        %v799 = vld [vmem:[%s315 + $0x1e0] sm:$0xff]
        %v800 = vld [vmem:[%s315 + $0x1e8] sm:$0xff]
        %v801 = vld [vmem:[%s315 + $0x1f0] sm:$0xff]
        %v802 = vld [vmem:[%s315 + $0x1f8] sm:$0xff]
        %v803 = vld [vmem:[#allocation2] sm:$0xff]
        %v804 = vld [vmem:[#allocation3] sm:$0xff]
        %s805 = smul.u32 %s33, 7
        %s806 = smul.u32 %s33, 56
        %s807 = sshra.s32 %s806, 3
        %s808 = sand.u32 %s806, 7
        %s809 = smul.u32 %s807, 4
        %s810 = smul.addr %s809, 8
        %s811 = scalar_lea.vmem [#allocation4], %s810
        %v812 = vld [vmem:[%s811] sm:$0xff]
        %v813 = vld [vmem:[%s811 + $0x8] sm:$0xff]
        %v814 = vld [vmem:[%s811 + $0x10] sm:$0xff]
        %v815 = vld [vmem:[%s811 + $0x18] sm:$0xff]
        %816 = vmatprep.subr.mxu0 %v740
        %817 = vmatpush1.msra.mxu0 %v739
        %818 = vmatprep.subr.mxu0 %v744
        %819 = vmatpush1.msra.mxu0 %v743
        %820 = vmatprep.subr.mxu0 %v748
        %821 = vmatpush1.msra.mxu0 %v747
        %822 = vmatprep.subr.mxu0 %v752
        %823 = vmatpush1.msra.mxu0 %v751
        %824 = vmatprep.subr.mxu0 %v756
        %825 = vmatpush1.msra.mxu0 %v755
        %826 = vmatprep.subr.mxu0 %v760
        %827 = vmatpush1.msra.mxu0 %v759
        %828 = vmatprep.subr.mxu0 %v764
        %829 = vmatpush1.msra.mxu0 %v763
        %830 = vmatprep.subr.mxu0 %v768
        %831 = vmatpush1.msra.mxu0 %v767
        %832 = vmatprep.subr.mxu0 %v772
        %833 = vmatpush1.msra.mxu0 %v771
        %834 = vmatprep.subr.mxu0 %v776
        %835 = vmatpush1.msra.mxu0 %v775
        %836 = vmatprep.subr.mxu0 %v780
        %837 = vmatpush1.msra.mxu0 %v779
        %838 = vmatprep.subr.mxu0 %v784
        %839 = vmatpush1.msra.mxu0 %v783
        %840 = vmatprep.subr.mxu0 %v788
        %841 = vmatpush1.msra.mxu0 %v787
        %842 = vmatprep.subr.mxu0 %v792
        %843 = vmatpush1.msra.mxu0 %v791
        %844 = vmatprep.subr.mxu0 %v796
        %845 = vmatpush1.msra.mxu0 %v795
        %846 = vmatprep.subr.mxu0 %v800
        %847 = vmatpush1.msra.mxu0 %v799
        %848 = vmatprep.subr.mxu0 0.0
        %849 = vmatpush1.msra.mxu0 0.0
        %850 = vmatprep.subr.mxu0 0.0
        %851 = vmatpush1.msra.mxu0 0.0
        %852 = vmatprep.subr.mxu0 0.0
        %853 = vmatpush1.msra.mxu0 0.0
        %854 = vmatprep.subr.mxu0 0.0
        %855 = vmatpush1.msra.mxu0 0.0
        %856 = vmatprep.subr.mxu0 0.0
        %857 = vmatpush1.msra.mxu0 0.0
        %858 = vmatprep.subr.mxu0 0.0
        %859 = vmatpush1.msra.mxu0 0.0
        %860 = vmatprep.subr.mxu0 0.0
        %861 = vmatpush1.msra.mxu0 0.0
        %862 = vmatprep.subr.mxu0 0.0
        %863 = vmatpush1.msra.mxu0 0.0
        %864 = vmatprep.subr.mxu0 0.0
        %865 = vmatpush1.msra.mxu0 0.0
        %866 = vmatprep.subr.mxu0 0.0
        %867 = vmatpush1.msra.mxu0 0.0
        %868 = vmatprep.subr.mxu0 0.0
        %869 = vmatpush1.msra.mxu0 0.0
        %870 = vmatprep.subr.mxu0 0.0
        %871 = vmatpush1.msra.mxu0 0.0
        %872 = vmatprep.subr.mxu0 0.0
        %873 = vmatpush1.msra.mxu0 0.0
        %874 = vmatprep.subr.mxu0 0.0
        %875 = vmatpush1.msra.mxu0 0.0
        %876 = vmatprep.subr.mxu0 0.0
        %877 = vmatpush1.msra.mxu0 0.0
        %878 = vmatprep.subr.mxu0 0.0
        %879 = vmatpush1.msra.mxu0 0.0
        %880 = vmatprep.mubr.f32.mxu0 0.0
        %881 = vmatmul.mubr.f32.gmra.mrb[0].mxu0 %v803
        %v882 = vpop.f32.mrb[0].mxu0
        %v883 = vadd.f32 0.0, %v882
        %v884 = vpop.f32.mrb[0].mxu0
        %v885 = vadd.f32 0.0, %v884
        %886 = vdwg.mxu0
        %887 = vmatprep.subr.mxu0 %v742
        %888 = vmatpush1.msra.mxu0 %v741
        %889 = vmatprep.subr.mxu0 %v746
        %890 = vmatpush1.msra.mxu0 %v745
        %891 = vmatprep.subr.mxu0 %v750
        %892 = vmatpush1.msra.mxu0 %v749
        %893 = vmatprep.subr.mxu0 %v754
        %894 = vmatpush1.msra.mxu0 %v753
        %895 = vmatprep.subr.mxu0 %v758
        %896 = vmatpush1.msra.mxu0 %v757
        %897 = vmatprep.subr.mxu0 %v762
        %898 = vmatpush1.msra.mxu0 %v761
        %899 = vmatprep.subr.mxu0 %v766
        %900 = vmatpush1.msra.mxu0 %v765
        %901 = vmatprep.subr.mxu0 %v770
        %902 = vmatpush1.msra.mxu0 %v769
        %903 = vmatprep.subr.mxu0 %v774
        %904 = vmatpush1.msra.mxu0 %v773
        %905 = vmatprep.subr.mxu0 %v778
        %906 = vmatpush1.msra.mxu0 %v777
        %907 = vmatprep.subr.mxu0 %v782
        %908 = vmatpush1.msra.mxu0 %v781
        %909 = vmatprep.subr.mxu0 %v786
        %910 = vmatpush1.msra.mxu0 %v785
        %911 = vmatprep.subr.mxu0 %v790
        %912 = vmatpush1.msra.mxu0 %v789
        %913 = vmatprep.subr.mxu0 %v794
        %914 = vmatpush1.msra.mxu0 %v793
        %915 = vmatprep.subr.mxu0 %v798
        %916 = vmatpush1.msra.mxu0 %v797
        %917 = vmatprep.subr.mxu0 %v802
        %918 = vmatpush1.msra.mxu0 %v801
        %919 = vmatprep.subr.mxu0 0.0
        %920 = vmatpush1.msra.mxu0 0.0
        %921 = vmatprep.subr.mxu0 0.0
        %922 = vmatpush1.msra.mxu0 0.0
        %923 = vmatprep.subr.mxu0 0.0
        %924 = vmatpush1.msra.mxu0 0.0
        %925 = vmatprep.subr.mxu0 0.0
        %926 = vmatpush1.msra.mxu0 0.0
        %927 = vmatprep.subr.mxu0 0.0
        %928 = vmatpush1.msra.mxu0 0.0
        %929 = vmatprep.subr.mxu0 0.0
        %930 = vmatpush1.msra.mxu0 0.0
        %931 = vmatprep.subr.mxu0 0.0
        %932 = vmatpush1.msra.mxu0 0.0
        %933 = vmatprep.subr.mxu0 0.0
        %934 = vmatpush1.msra.mxu0 0.0
        %935 = vmatprep.subr.mxu0 0.0
        %936 = vmatpush1.msra.mxu0 0.0
        %937 = vmatprep.subr.mxu0 0.0
        %938 = vmatpush1.msra.mxu0 0.0
        %939 = vmatprep.subr.mxu0 0.0
        %940 = vmatpush1.msra.mxu0 0.0
        %941 = vmatprep.subr.mxu0 0.0
        %942 = vmatpush1.msra.mxu0 0.0
        %943 = vmatprep.subr.mxu0 0.0
        %944 = vmatpush1.msra.mxu0 0.0
        %945 = vmatprep.subr.mxu0 0.0
        %946 = vmatpush1.msra.mxu0 0.0
        %947 = vmatprep.subr.mxu0 0.0
        %948 = vmatpush1.msra.mxu0 0.0
        %949 = vmatprep.subr.mxu0 0.0
        %950 = vmatpush1.msra.mxu0 0.0
        %951 = vmatprep.mubr.f32.mxu0 0.0
        %952 = vmatmul.mubr.f32.gmra.mrb[0].mxu0 %v803
        %v953 = vpop.f32.mrb[0].mxu0
        %v954 = vadd.f32 0.0, %v953
        %v955 = vpop.f32.mrb[0].mxu0
        %v956 = vadd.f32 0.0, %v955
        %957 = vdwg.mxu0
        %v958 = vadd.f32 %v812, %v883
        %v959 = vadd.f32 %v813, %v885
        %v960 = vadd.f32 %v814, %v954
        %v961 = vadd.f32 %v815, %v956
        %v962 = vxor.u32 %v958, 2147483648
        %v963 = vmul.f32 %v962, 1.442695
        %v964 = vpow.pop %v963
        %v965 = vadd.f32 %v964, 1.0
        %v966 = vrcp.pop %v965
        %v967 = vmul.f32 1.0, %v966
        %v968 = vxor.u32 %v959, 2147483648
        %v969 = vmul.f32 %v968, 1.442695
        %v970 = vpow.pop %v969
        %v971 = vadd.f32 %v970, 1.0
        %v972 = vrcp.pop %v971
        %v973 = vmul.f32 1.0, %v972
        %v974 = vtanh.pop %v960
        %v975 = vxor.u32 %v961, 2147483648
        %v976 = vmul.f32 %v975, 1.442695
        %v977 = vpow.pop %v976
        %v978 = vadd.f32 %v977, 1.0
        %v979 = vrcp.pop %v978
        %v980 = vmul.f32 1.0, %v979
        %v981 = vmul.f32 %v973, %v804
        %v982 = vmul.f32 %v967, %v974
        %v983 = vadd.f32 %v981, %v982
        %v984 = vtanh.pop %v983
        %v985 = vmul.f32 %v980, %v984
        %s986 = smul.u32 %s805, 8
        %s987 = scalar_lea.vmem %s357, %s986 [#allocation10]
        %988 = vst [vmem:[%s987] sm:$0xff] %v985
        %s989 = ssub.s32 1, %s33
        %s990 = smul.u32 %s33, 6
        %s991 = sadd.s32 %s989, %s990
        %s992 = smul.u32 %s991, 8
        %s993 = sshra.s32 %s992, 3
        %s994 = sand.u32 %s992, 7
        %s995 = smul.u32 %s993, 4
        %s996 = smul.addr %s995, 8
        %s997 = scalar_lea.vmem [#allocation4], %s996
        %v998 = vld [vmem:[%s997] sm:$0xff]
        %v999 = vld [vmem:[%s997 + $0x8] sm:$0xff]
        %v1000 = vld [vmem:[%s997 + $0x10] sm:$0xff]
        %v1001 = vld [vmem:[%s997 + $0x18] sm:$0xff]
        %1002 = vmatprep.subr.mxu0 %v740
        %1003 = vmatpush1.msra.mxu0 %v739
        %1004 = vmatprep.subr.mxu0 %v744
        %1005 = vmatpush1.msra.mxu0 %v743
        %1006 = vmatprep.subr.mxu0 %v748
        %1007 = vmatpush1.msra.mxu0 %v747
        %1008 = vmatprep.subr.mxu0 %v752
        %1009 = vmatpush1.msra.mxu0 %v751
        %1010 = vmatprep.subr.mxu0 %v756
        %1011 = vmatpush1.msra.mxu0 %v755
        %1012 = vmatprep.subr.mxu0 %v760
        %1013 = vmatpush1.msra.mxu0 %v759
        %1014 = vmatprep.subr.mxu0 %v764
        %1015 = vmatpush1.msra.mxu0 %v763
        %1016 = vmatprep.subr.mxu0 %v768
        %1017 = vmatpush1.msra.mxu0 %v767
        %1018 = vmatprep.subr.mxu0 %v772
        %1019 = vmatpush1.msra.mxu0 %v771
        %1020 = vmatprep.subr.mxu0 %v776
        %1021 = vmatpush1.msra.mxu0 %v775
        %1022 = vmatprep.subr.mxu0 %v780
        %1023 = vmatpush1.msra.mxu0 %v779
        %1024 = vmatprep.subr.mxu0 %v784
        %1025 = vmatpush1.msra.mxu0 %v783
        %1026 = vmatprep.subr.mxu0 %v788
        %1027 = vmatpush1.msra.mxu0 %v787
        %1028 = vmatprep.subr.mxu0 %v792
        %1029 = vmatpush1.msra.mxu0 %v791
        %1030 = vmatprep.subr.mxu0 %v796
        %1031 = vmatpush1.msra.mxu0 %v795
        %1032 = vmatprep.subr.mxu0 %v800
        %1033 = vmatpush1.msra.mxu0 %v799
        %1034 = vmatprep.subr.mxu0 0.0
        %1035 = vmatpush1.msra.mxu0 0.0
        %1036 = vmatprep.subr.mxu0 0.0
        %1037 = vmatpush1.msra.mxu0 0.0
        %1038 = vmatprep.subr.mxu0 0.0
        %1039 = vmatpush1.msra.mxu0 0.0
        %1040 = vmatprep.subr.mxu0 0.0
        %1041 = vmatpush1.msra.mxu0 0.0
        %1042 = vmatprep.subr.mxu0 0.0
        %1043 = vmatpush1.msra.mxu0 0.0
        %1044 = vmatprep.subr.mxu0 0.0
        %1045 = vmatpush1.msra.mxu0 0.0
        %1046 = vmatprep.subr.mxu0 0.0
        %1047 = vmatpush1.msra.mxu0 0.0
        %1048 = vmatprep.subr.mxu0 0.0
        %1049 = vmatpush1.msra.mxu0 0.0
        %1050 = vmatprep.subr.mxu0 0.0
        %1051 = vmatpush1.msra.mxu0 0.0
        %1052 = vmatprep.subr.mxu0 0.0
        %1053 = vmatpush1.msra.mxu0 0.0
        %1054 = vmatprep.subr.mxu0 0.0
        %1055 = vmatpush1.msra.mxu0 0.0
        %1056 = vmatprep.subr.mxu0 0.0
        %1057 = vmatpush1.msra.mxu0 0.0
        %1058 = vmatprep.subr.mxu0 0.0
        %1059 = vmatpush1.msra.mxu0 0.0
        %1060 = vmatprep.subr.mxu0 0.0
        %1061 = vmatpush1.msra.mxu0 0.0
        %1062 = vmatprep.subr.mxu0 0.0
        %1063 = vmatpush1.msra.mxu0 0.0
        %1064 = vmatprep.subr.mxu0 0.0
        %1065 = vmatpush1.msra.mxu0 0.0
        %1066 = vmatprep.mubr.f32.mxu0 0.0
        %1067 = vmatmul.mubr.f32.gmra.mrb[0].mxu0 %v985
        %v1068 = vpop.f32.mrb[0].mxu0
        %v1069 = vadd.f32 0.0, %v1068
        %v1070 = vpop.f32.mrb[0].mxu0
        %v1071 = vadd.f32 0.0, %v1070
        %1072 = vdwg.mxu0
        %1073 = vmatprep.subr.mxu0 %v742
        %1074 = vmatpush1.msra.mxu0 %v741
        %1075 = vmatprep.subr.mxu0 %v746
        %1076 = vmatpush1.msra.mxu0 %v745
        %1077 = vmatprep.subr.mxu0 %v750
        %1078 = vmatpush1.msra.mxu0 %v749
        %1079 = vmatprep.subr.mxu0 %v754
        %1080 = vmatpush1.msra.mxu0 %v753
        %1081 = vmatprep.subr.mxu0 %v758
        %1082 = vmatpush1.msra.mxu0 %v757
        %1083 = vmatprep.subr.mxu0 %v762
        %1084 = vmatpush1.msra.mxu0 %v761
        %1085 = vmatprep.subr.mxu0 %v766
        %1086 = vmatpush1.msra.mxu0 %v765
        %1087 = vmatprep.subr.mxu0 %v770
        %1088 = vmatpush1.msra.mxu0 %v769
        %1089 = vmatprep.subr.mxu0 %v774
        %1090 = vmatpush1.msra.mxu0 %v773
        %1091 = vmatprep.subr.mxu0 %v778
        %1092 = vmatpush1.msra.mxu0 %v777
        %1093 = vmatprep.subr.mxu0 %v782
        %1094 = vmatpush1.msra.mxu0 %v781
        %1095 = vmatprep.subr.mxu0 %v786
        %1096 = vmatpush1.msra.mxu0 %v785
        %1097 = vmatprep.subr.mxu0 %v790
        %1098 = vmatpush1.msra.mxu0 %v789
        %1099 = vmatprep.subr.mxu0 %v794
        %1100 = vmatpush1.msra.mxu0 %v793
        %1101 = vmatprep.subr.mxu0 %v798
        %1102 = vmatpush1.msra.mxu0 %v797
        %1103 = vmatprep.subr.mxu0 %v802
        %1104 = vmatpush1.msra.mxu0 %v801
        %1105 = vmatprep.subr.mxu0 0.0
        %1106 = vmatpush1.msra.mxu0 0.0
        %1107 = vmatprep.subr.mxu0 0.0
        %1108 = vmatpush1.msra.mxu0 0.0
        %1109 = vmatprep.subr.mxu0 0.0
        %1110 = vmatpush1.msra.mxu0 0.0
        %1111 = vmatprep.subr.mxu0 0.0
        %1112 = vmatpush1.msra.mxu0 0.0
        %1113 = vmatprep.subr.mxu0 0.0
        %1114 = vmatpush1.msra.mxu0 0.0
        %1115 = vmatprep.subr.mxu0 0.0
        %1116 = vmatpush1.msra.mxu0 0.0
        %1117 = vmatprep.subr.mxu0 0.0
        %1118 = vmatpush1.msra.mxu0 0.0
        %1119 = vmatprep.subr.mxu0 0.0
        %1120 = vmatpush1.msra.mxu0 0.0
        %1121 = vmatprep.subr.mxu0 0.0
        %1122 = vmatpush1.msra.mxu0 0.0
        %1123 = vmatprep.subr.mxu0 0.0
        %1124 = vmatpush1.msra.mxu0 0.0
        %1125 = vmatprep.subr.mxu0 0.0
        %1126 = vmatpush1.msra.mxu0 0.0
        %1127 = vmatprep.subr.mxu0 0.0
        %1128 = vmatpush1.msra.mxu0 0.0
        %1129 = vmatprep.subr.mxu0 0.0
        %1130 = vmatpush1.msra.mxu0 0.0
        %1131 = vmatprep.subr.mxu0 0.0
        %1132 = vmatpush1.msra.mxu0 0.0
        %1133 = vmatprep.subr.mxu0 0.0
        %1134 = vmatpush1.msra.mxu0 0.0
        %1135 = vmatprep.subr.mxu0 0.0
        %1136 = vmatpush1.msra.mxu0 0.0
        %1137 = vmatprep.mubr.f32.mxu0 0.0
        %1138 = vmatmul.mubr.f32.gmra.mrb[0].mxu0 %v985
        %v1139 = vpop.f32.mrb[0].mxu0
        %v1140 = vadd.f32 0.0, %v1139
        %v1141 = vpop.f32.mrb[0].mxu0
        %v1142 = vadd.f32 0.0, %v1141
        %1143 = vdwg.mxu0
        %v1144 = vadd.f32 %v998, %v1069
        %v1145 = vadd.f32 %v999, %v1071
        %v1146 = vadd.f32 %v1000, %v1140
        %v1147 = vadd.f32 %v1001, %v1142
        %v1148 = vxor.u32 %v1144, 2147483648
        %v1149 = vmul.f32 %v1148, 1.442695
        %v1150 = vpow.pop %v1149
        %v1151 = vadd.f32 %v1150, 1.0
        %v1152 = vrcp.pop %v1151
        %v1153 = vmul.f32 1.0, %v1152
        %v1154 = vxor.u32 %v1145, 2147483648
        %v1155 = vmul.f32 %v1154, 1.442695
        %v1156 = vpow.pop %v1155
        %v1157 = vadd.f32 %v1156, 1.0
        %v1158 = vrcp.pop %v1157
        %v1159 = vmul.f32 1.0, %v1158
        %v1160 = vtanh.pop %v1146
        %v1161 = vxor.u32 %v1147, 2147483648
        %v1162 = vmul.f32 %v1161, 1.442695
        %v1163 = vpow.pop %v1162
        %v1164 = vadd.f32 %v1163, 1.0
        %v1165 = vrcp.pop %v1164
        %v1166 = vmul.f32 1.0, %v1165
        %v1167 = vmul.f32 %v1159, %v983
        %v1168 = vmul.f32 %v1153, %v1160
        %v1169 = vadd.f32 %v1167, %v1168
        %v1170 = vtanh.pop %v1169
        %v1171 = vmul.f32 %v1166, %v1170
        %s1172 = scalar_lea.vmem %s357, %s992 [#allocation10]
        %1173 = vst [vmem:[%s1172] sm:$0xff] %v1171
        %s1174 = smul.u32 %s989, 2
        %s1175 = smul.u32 %s33, 5
        %s1176 = sadd.s32 %s1174, %s1175
        %s1177 = smul.u32 %s1176, 8
        %s1178 = sshra.s32 %s1177, 3
        %s1179 = sand.u32 %s1177, 7
        %s1180 = smul.u32 %s1178, 4
        %s1181 = smul.addr %s1180, 8
        %s1182 = scalar_lea.vmem [#allocation4], %s1181
        %v1183 = vld [vmem:[%s1182] sm:$0xff]
        %v1184 = vld [vmem:[%s1182 + $0x8] sm:$0xff]
        %v1185 = vld [vmem:[%s1182 + $0x10] sm:$0xff]
        %v1186 = vld [vmem:[%s1182 + $0x18] sm:$0xff]
        %1187 = vmatprep.subr.mxu0 %v740
        %1188 = vmatpush1.msra.mxu0 %v739
        %1189 = vmatprep.subr.mxu0 %v744
        %1190 = vmatpush1.msra.mxu0 %v743
        %1191 = vmatprep.subr.mxu0 %v748
        %1192 = vmatpush1.msra.mxu0 %v747
        %1193 = vmatprep.subr.mxu0 %v752
        %1194 = vmatpush1.msra.mxu0 %v751
        %1195 = vmatprep.subr.mxu0 %v756
        %1196 = vmatpush1.msra.mxu0 %v755
        %1197 = vmatprep.subr.mxu0 %v760
        %1198 = vmatpush1.msra.mxu0 %v759
        %1199 = vmatprep.subr.mxu0 %v764
        %1200 = vmatpush1.msra.mxu0 %v763
        %1201 = vmatprep.subr.mxu0 %v768
        %1202 = vmatpush1.msra.mxu0 %v767
        %1203 = vmatprep.subr.mxu0 %v772
        %1204 = vmatpush1.msra.mxu0 %v771
        %1205 = vmatprep.subr.mxu0 %v776
        %1206 = vmatpush1.msra.mxu0 %v775
        %1207 = vmatprep.subr.mxu0 %v780
        %1208 = vmatpush1.msra.mxu0 %v779
        %1209 = vmatprep.subr.mxu0 %v784
        %1210 = vmatpush1.msra.mxu0 %v783
        %1211 = vmatprep.subr.mxu0 %v788
        %1212 = vmatpush1.msra.mxu0 %v787
        %1213 = vmatprep.subr.mxu0 %v792
        %1214 = vmatpush1.msra.mxu0 %v791
        %1215 = vmatprep.subr.mxu0 %v796
        %1216 = vmatpush1.msra.mxu0 %v795
        %1217 = vmatprep.subr.mxu0 %v800
        %1218 = vmatpush1.msra.mxu0 %v799
        %1219 = vmatprep.subr.mxu0 0.0
        %1220 = vmatpush1.msra.mxu0 0.0
        %1221 = vmatprep.subr.mxu0 0.0
        %1222 = vmatpush1.msra.mxu0 0.0
        %1223 = vmatprep.subr.mxu0 0.0
        %1224 = vmatpush1.msra.mxu0 0.0
        %1225 = vmatprep.subr.mxu0 0.0
        %1226 = vmatpush1.msra.mxu0 0.0
        %1227 = vmatprep.subr.mxu0 0.0
        %1228 = vmatpush1.msra.mxu0 0.0
        %1229 = vmatprep.subr.mxu0 0.0
        %1230 = vmatpush1.msra.mxu0 0.0
        %1231 = vmatprep.subr.mxu0 0.0
        %1232 = vmatpush1.msra.mxu0 0.0
        %1233 = vmatprep.subr.mxu0 0.0
        %1234 = vmatpush1.msra.mxu0 0.0
        %1235 = vmatprep.subr.mxu0 0.0
        %1236 = vmatpush1.msra.mxu0 0.0
        %1237 = vmatprep.subr.mxu0 0.0
        %1238 = vmatpush1.msra.mxu0 0.0
        %1239 = vmatprep.subr.mxu0 0.0
        %1240 = vmatpush1.msra.mxu0 0.0
        %1241 = vmatprep.subr.mxu0 0.0
        %1242 = vmatpush1.msra.mxu0 0.0
        %1243 = vmatprep.subr.mxu0 0.0
        %1244 = vmatpush1.msra.mxu0 0.0
        %1245 = vmatprep.subr.mxu0 0.0
        %1246 = vmatpush1.msra.mxu0 0.0
        %1247 = vmatprep.subr.mxu0 0.0
        %1248 = vmatpush1.msra.mxu0 0.0
        %1249 = vmatprep.subr.mxu0 0.0
        %1250 = vmatpush1.msra.mxu0 0.0
        %1251 = vmatprep.mubr.f32.mxu0 0.0
        %1252 = vmatmul.mubr.f32.gmra.mrb[0].mxu0 %v1171
        %v1253 = vpop.f32.mrb[0].mxu0
        %v1254 = vadd.f32 0.0, %v1253
        %v1255 = vpop.f32.mrb[0].mxu0
        %v1256 = vadd.f32 0.0, %v1255
        %1257 = vdwg.mxu0
        %1258 = vmatprep.subr.mxu0 %v742
        %1259 = vmatpush1.msra.mxu0 %v741
        %1260 = vmatprep.subr.mxu0 %v746
        %1261 = vmatpush1.msra.mxu0 %v745
        %1262 = vmatprep.subr.mxu0 %v750
        %1263 = vmatpush1.msra.mxu0 %v749
        %1264 = vmatprep.subr.mxu0 %v754
        %1265 = vmatpush1.msra.mxu0 %v753
        %1266 = vmatprep.subr.mxu0 %v758
        %1267 = vmatpush1.msra.mxu0 %v757
        %1268 = vmatprep.subr.mxu0 %v762
        %1269 = vmatpush1.msra.mxu0 %v761
        %1270 = vmatprep.subr.mxu0 %v766
        %1271 = vmatpush1.msra.mxu0 %v765
        %1272 = vmatprep.subr.mxu0 %v770
        %1273 = vmatpush1.msra.mxu0 %v769
        %1274 = vmatprep.subr.mxu0 %v774
        %1275 = vmatpush1.msra.mxu0 %v773
        %1276 = vmatprep.subr.mxu0 %v778
        %1277 = vmatpush1.msra.mxu0 %v777
        %1278 = vmatprep.subr.mxu0 %v782
        %1279 = vmatpush1.msra.mxu0 %v781
        %1280 = vmatprep.subr.mxu0 %v786
        %1281 = vmatpush1.msra.mxu0 %v785
        %1282 = vmatprep.subr.mxu0 %v790
        %1283 = vmatpush1.msra.mxu0 %v789
        %1284 = vmatprep.subr.mxu0 %v794
        %1285 = vmatpush1.msra.mxu0 %v793
        %1286 = vmatprep.subr.mxu0 %v798
        %1287 = vmatpush1.msra.mxu0 %v797
        %1288 = vmatprep.subr.mxu0 %v802
        %1289 = vmatpush1.msra.mxu0 %v801
        %1290 = vmatprep.subr.mxu0 0.0
        %1291 = vmatpush1.msra.mxu0 0.0
        %1292 = vmatprep.subr.mxu0 0.0
        %1293 = vmatpush1.msra.mxu0 0.0
        %1294 = vmatprep.subr.mxu0 0.0
        %1295 = vmatpush1.msra.mxu0 0.0
        %1296 = vmatprep.subr.mxu0 0.0
        %1297 = vmatpush1.msra.mxu0 0.0
        %1298 = vmatprep.subr.mxu0 0.0
        %1299 = vmatpush1.msra.mxu0 0.0
        %1300 = vmatprep.subr.mxu0 0.0
        %1301 = vmatpush1.msra.mxu0 0.0
        %1302 = vmatprep.subr.mxu0 0.0
        %1303 = vmatpush1.msra.mxu0 0.0
        %1304 = vmatprep.subr.mxu0 0.0
        %1305 = vmatpush1.msra.mxu0 0.0
        %1306 = vmatprep.subr.mxu0 0.0
        %1307 = vmatpush1.msra.mxu0 0.0
        %1308 = vmatprep.subr.mxu0 0.0
        %1309 = vmatpush1.msra.mxu0 0.0
        %1310 = vmatprep.subr.mxu0 0.0
        %1311 = vmatpush1.msra.mxu0 0.0
        %1312 = vmatprep.subr.mxu0 0.0
        %1313 = vmatpush1.msra.mxu0 0.0
        %1314 = vmatprep.subr.mxu0 0.0
        %1315 = vmatpush1.msra.mxu0 0.0
        %1316 = vmatprep.subr.mxu0 0.0
        %1317 = vmatpush1.msra.mxu0 0.0
        %1318 = vmatprep.subr.mxu0 0.0
        %1319 = vmatpush1.msra.mxu0 0.0
        %1320 = vmatprep.subr.mxu0 0.0
        %1321 = vmatpush1.msra.mxu0 0.0
        %1322 = vmatprep.mubr.f32.mxu0 0.0
        %1323 = vmatmul.mubr.f32.gmra.mrb[0].mxu0 %v1171
        %v1324 = vpop.f32.mrb[0].mxu0
        %v1325 = vadd.f32 0.0, %v1324
        %v1326 = vpop.f32.mrb[0].mxu0
        %v1327 = vadd.f32 0.0, %v1326
        %1328 = vdwg.mxu0
        %v1329 = vadd.f32 %v1183, %v1254
        %v1330 = vadd.f32 %v1184, %v1256
        %v1331 = vadd.f32 %v1185, %v1325
        %v1332 = vadd.f32 %v1186, %v1327
        %v1333 = vxor.u32 %v1329, 2147483648
        %v1334 = vmul.f32 %v1333, 1.442695
        %v1335 = vpow.pop %v1334
        %v1336 = vadd.f32 %v1335, 1.0
        %v1337 = vrcp.pop %v1336
        %v1338 = vmul.f32 1.0, %v1337
        %v1339 = vxor.u32 %v1330, 2147483648
        %v1340 = vmul.f32 %v1339, 1.442695
        %v1341 = vpow.pop %v1340
        %v1342 = vadd.f32 %v1341, 1.0
        %v1343 = vrcp.pop %v1342
        %v1344 = vmul.f32 1.0, %v1343
        %v1345 = vtanh.pop %v1331
        %v1346 = vxor.u32 %v1332, 2147483648
        %v1347 = vmul.f32 %v1346, 1.442695
        %v1348 = vpow.pop %v1347
        %v1349 = vadd.f32 %v1348, 1.0
        %v1350 = vrcp.pop %v1349
        %v1351 = vmul.f32 1.0, %v1350
        %v1352 = vmul.f32 %v1344, %v1169
        %v1353 = vmul.f32 %v1338, %v1345
        %v1354 = vadd.f32 %v1352, %v1353
        %v1355 = vtanh.pop %v1354
        %v1356 = vmul.f32 %v1351, %v1355
        %s1357 = scalar_lea.vmem %s357, %s1177 [#allocation10]
        %1358 = vst [vmem:[%s1357] sm:$0xff] %v1356
        %s1359 = smul.u32 %s989, 3
        %s1360 = smul.u32 %s33, 4
        %s1361 = sadd.s32 %s1359, %s1360
        %s1362 = smul.u32 %s1361, 8
        %s1363 = sshra.s32 %s1362, 3
        %s1364 = sand.u32 %s1362, 7
        %s1365 = smul.u32 %s1363, 4
        %s1366 = smul.addr %s1365, 8
        %s1367 = scalar_lea.vmem [#allocation4], %s1366
        %v1368 = vld [vmem:[%s1367] sm:$0xff]
        %v1369 = vld [vmem:[%s1367 + $0x8] sm:$0xff]
        %v1370 = vld [vmem:[%s1367 + $0x10] sm:$0xff]
        %v1371 = vld [vmem:[%s1367 + $0x18] sm:$0xff]
        %1372 = vmatprep.subr.mxu0 %v740
        %1373 = vmatpush1.msra.mxu0 %v739
        %1374 = vmatprep.subr.mxu0 %v744
        %1375 = vmatpush1.msra.mxu0 %v743
        %1376 = vmatprep.subr.mxu0 %v748
        %1377 = vmatpush1.msra.mxu0 %v747
        %1378 = vmatprep.subr.mxu0 %v752
        %1379 = vmatpush1.msra.mxu0 %v751
        %1380 = vmatprep.subr.mxu0 %v756
        %1381 = vmatpush1.msra.mxu0 %v755
        %1382 = vmatprep.subr.mxu0 %v760
        %1383 = vmatpush1.msra.mxu0 %v759
        %1384 = vmatprep.subr.mxu0 %v764
        %1385 = vmatpush1.msra.mxu0 %v763
        %1386 = vmatprep.subr.mxu0 %v768
        %1387 = vmatpush1.msra.mxu0 %v767
        %1388 = vmatprep.subr.mxu0 %v772
        %1389 = vmatpush1.msra.mxu0 %v771
        %1390 = vmatprep.subr.mxu0 %v776
        %1391 = vmatpush1.msra.mxu0 %v775
        %1392 = vmatprep.subr.mxu0 %v780
        %1393 = vmatpush1.msra.mxu0 %v779
        %1394 = vmatprep.subr.mxu0 %v784
        %1395 = vmatpush1.msra.mxu0 %v783
        %1396 = vmatprep.subr.mxu0 %v788
        %1397 = vmatpush1.msra.mxu0 %v787
        %1398 = vmatprep.subr.mxu0 %v792
        %1399 = vmatpush1.msra.mxu0 %v791
        %1400 = vmatprep.subr.mxu0 %v796
        %1401 = vmatpush1.msra.mxu0 %v795
        %1402 = vmatprep.subr.mxu0 %v800
        %1403 = vmatpush1.msra.mxu0 %v799
        %1404 = vmatprep.subr.mxu0 0.0
        %1405 = vmatpush1.msra.mxu0 0.0
        %1406 = vmatprep.subr.mxu0 0.0
        %1407 = vmatpush1.msra.mxu0 0.0
        %1408 = vmatprep.subr.mxu0 0.0
        %1409 = vmatpush1.msra.mxu0 0.0
        %1410 = vmatprep.subr.mxu0 0.0
        %1411 = vmatpush1.msra.mxu0 0.0
        %1412 = vmatprep.subr.mxu0 0.0
        %1413 = vmatpush1.msra.mxu0 0.0
        %1414 = vmatprep.subr.mxu0 0.0
        %1415 = vmatpush1.msra.mxu0 0.0
        %1416 = vmatprep.subr.mxu0 0.0
        %1417 = vmatpush1.msra.mxu0 0.0
        %1418 = vmatprep.subr.mxu0 0.0
        %1419 = vmatpush1.msra.mxu0 0.0
        %1420 = vmatprep.subr.mxu0 0.0
        %1421 = vmatpush1.msra.mxu0 0.0
        %1422 = vmatprep.subr.mxu0 0.0
        %1423 = vmatpush1.msra.mxu0 0.0
        %1424 = vmatprep.subr.mxu0 0.0
        %1425 = vmatpush1.msra.mxu0 0.0
        %1426 = vmatprep.subr.mxu0 0.0
        %1427 = vmatpush1.msra.mxu0 0.0
        %1428 = vmatprep.subr.mxu0 0.0
        %1429 = vmatpush1.msra.mxu0 0.0
        %1430 = vmatprep.subr.mxu0 0.0
        %1431 = vmatpush1.msra.mxu0 0.0
        %1432 = vmatprep.subr.mxu0 0.0
        %1433 = vmatpush1.msra.mxu0 0.0
        %1434 = vmatprep.subr.mxu0 0.0
        %1435 = vmatpush1.msra.mxu0 0.0
        %1436 = vmatprep.mubr.f32.mxu0 0.0
        %1437 = vmatmul.mubr.f32.gmra.mrb[0].mxu0 %v1356
        %v1438 = vpop.f32.mrb[0].mxu0
        %v1439 = vadd.f32 0.0, %v1438
        %v1440 = vpop.f32.mrb[0].mxu0
        %v1441 = vadd.f32 0.0, %v1440
        %1442 = vdwg.mxu0
        %1443 = vmatprep.subr.mxu0 %v742
        %1444 = vmatpush1.msra.mxu0 %v741
        %1445 = vmatprep.subr.mxu0 %v746
        %1446 = vmatpush1.msra.mxu0 %v745
        %1447 = vmatprep.subr.mxu0 %v750
        %1448 = vmatpush1.msra.mxu0 %v749
        %1449 = vmatprep.subr.mxu0 %v754
        %1450 = vmatpush1.msra.mxu0 %v753
        %1451 = vmatprep.subr.mxu0 %v758
        %1452 = vmatpush1.msra.mxu0 %v757
        %1453 = vmatprep.subr.mxu0 %v762
        %1454 = vmatpush1.msra.mxu0 %v761
        %1455 = vmatprep.subr.mxu0 %v766
        %1456 = vmatpush1.msra.mxu0 %v765
        %1457 = vmatprep.subr.mxu0 %v770
        %1458 = vmatpush1.msra.mxu0 %v769
        %1459 = vmatprep.subr.mxu0 %v774
        %1460 = vmatpush1.msra.mxu0 %v773
        %1461 = vmatprep.subr.mxu0 %v778
        %1462 = vmatpush1.msra.mxu0 %v777
        %1463 = vmatprep.subr.mxu0 %v782
        %1464 = vmatpush1.msra.mxu0 %v781
        %1465 = vmatprep.subr.mxu0 %v786
        %1466 = vmatpush1.msra.mxu0 %v785
        %1467 = vmatprep.subr.mxu0 %v790
        %1468 = vmatpush1.msra.mxu0 %v789
        %1469 = vmatprep.subr.mxu0 %v794
        %1470 = vmatpush1.msra.mxu0 %v793
        %1471 = vmatprep.subr.mxu0 %v798
        %1472 = vmatpush1.msra.mxu0 %v797
        %1473 = vmatprep.subr.mxu0 %v802
        %1474 = vmatpush1.msra.mxu0 %v801
        %1475 = vmatprep.subr.mxu0 0.0
        %1476 = vmatpush1.msra.mxu0 0.0
        %1477 = vmatprep.subr.mxu0 0.0
        %1478 = vmatpush1.msra.mxu0 0.0
        %1479 = vmatprep.subr.mxu0 0.0
        %1480 = vmatpush1.msra.mxu0 0.0
        %1481 = vmatprep.subr.mxu0 0.0
        %1482 = vmatpush1.msra.mxu0 0.0
        %1483 = vmatprep.subr.mxu0 0.0
        %1484 = vmatpush1.msra.mxu0 0.0
        %1485 = vmatprep.subr.mxu0 0.0
        %1486 = vmatpush1.msra.mxu0 0.0
        %1487 = vmatprep.subr.mxu0 0.0
        %1488 = vmatpush1.msra.mxu0 0.0
        %1489 = vmatprep.subr.mxu0 0.0
        %1490 = vmatpush1.msra.mxu0 0.0
        %1491 = vmatprep.subr.mxu0 0.0
        %1492 = vmatpush1.msra.mxu0 0.0
        %1493 = vmatprep.subr.mxu0 0.0
        %1494 = vmatpush1.msra.mxu0 0.0
        %1495 = vmatprep.subr.mxu0 0.0
        %1496 = vmatpush1.msra.mxu0 0.0
        %1497 = vmatprep.subr.mxu0 0.0
        %1498 = vmatpush1.msra.mxu0 0.0
        %1499 = vmatprep.subr.mxu0 0.0
        %1500 = vmatpush1.msra.mxu0 0.0
        %1501 = vmatprep.subr.mxu0 0.0
        %1502 = vmatpush1.msra.mxu0 0.0
        %1503 = vmatprep.subr.mxu0 0.0
        %1504 = vmatpush1.msra.mxu0 0.0
        %1505 = vmatprep.subr.mxu0 0.0
        %1506 = vmatpush1.msra.mxu0 0.0
        %1507 = vmatprep.mubr.f32.mxu0 0.0
        %1508 = vmatmul.mubr.f32.gmra.mrb[0].mxu0 %v1356
        %v1509 = vpop.f32.mrb[0].mxu0
        %v1510 = vadd.f32 0.0, %v1509
        %v1511 = vpop.f32.mrb[0].mxu0
        %v1512 = vadd.f32 0.0, %v1511
        %1513 = vdwg.mxu0
        %v1514 = vadd.f32 %v1368, %v1439
        %v1515 = vadd.f32 %v1369, %v1441
        %v1516 = vadd.f32 %v1370, %v1510
        %v1517 = vadd.f32 %v1371, %v1512
        %v1518 = vxor.u32 %v1514, 2147483648
        %v1519 = vmul.f32 %v1518, 1.442695
        %v1520 = vpow.pop %v1519
        %v1521 = vadd.f32 %v1520, 1.0
        %v1522 = vrcp.pop %v1521
        %v1523 = vmul.f32 1.0, %v1522
        %v1524 = vxor.u32 %v1515, 2147483648
        %v1525 = vmul.f32 %v1524, 1.442695
        %v1526 = vpow.pop %v1525
        %v1527 = vadd.f32 %v1526, 1.0
        %v1528 = vrcp.pop %v1527
        %v1529 = vmul.f32 1.0, %v1528
        %v1530 = vtanh.pop %v1516
        %v1531 = vxor.u32 %v1517, 2147483648
        %v1532 = vmul.f32 %v1531, 1.442695
        %v1533 = vpow.pop %v1532
        %v1534 = vadd.f32 %v1533, 1.0
        %v1535 = vrcp.pop %v1534
        %v1536 = vmul.f32 1.0, %v1535
        %v1537 = vmul.f32 %v1529, %v1354
        %v1538 = vmul.f32 %v1523, %v1530
        %v1539 = vadd.f32 %v1537, %v1538
        %v1540 = vtanh.pop %v1539
        %v1541 = vmul.f32 %v1536, %v1540
        %s1542 = scalar_lea.vmem %s357, %s1362 [#allocation10]
        %1543 = vst [vmem:[%s1542] sm:$0xff] %v1541
        %s1544 = smul.u32 %s989, 4
        %s1545 = smul.u32 %s33, 3
        %s1546 = sadd.s32 %s1544, %s1545
        %s1547 = smul.u32 %s1546, 8
        %s1548 = sshra.s32 %s1547, 3
        %s1549 = sand.u32 %s1547, 7
        %s1550 = smul.u32 %s1548, 4
        %s1551 = smul.addr %s1550, 8
        %s1552 = scalar_lea.vmem [#allocation4], %s1551
        %v1553 = vld [vmem:[%s1552] sm:$0xff]
        %v1554 = vld [vmem:[%s1552 + $0x8] sm:$0xff]
        %v1555 = vld [vmem:[%s1552 + $0x10] sm:$0xff]
        %v1556 = vld [vmem:[%s1552 + $0x18] sm:$0xff]
        %1557 = vmatprep.subr.mxu0 %v740
        %1558 = vmatpush1.msra.mxu0 %v739
        %1559 = vmatprep.subr.mxu0 %v744
        %1560 = vmatpush1.msra.mxu0 %v743
        %1561 = vmatprep.subr.mxu0 %v748
        %1562 = vmatpush1.msra.mxu0 %v747
        %1563 = vmatprep.subr.mxu0 %v752
        %1564 = vmatpush1.msra.mxu0 %v751
        %1565 = vmatprep.subr.mxu0 %v756
        %1566 = vmatpush1.msra.mxu0 %v755
        %1567 = vmatprep.subr.mxu0 %v760
        %1568 = vmatpush1.msra.mxu0 %v759
        %1569 = vmatprep.subr.mxu0 %v764
        %1570 = vmatpush1.msra.mxu0 %v763
        %1571 = vmatprep.subr.mxu0 %v768
        %1572 = vmatpush1.msra.mxu0 %v767
        %1573 = vmatprep.subr.mxu0 %v772
        %1574 = vmatpush1.msra.mxu0 %v771
        %1575 = vmatprep.subr.mxu0 %v776
        %1576 = vmatpush1.msra.mxu0 %v775
        %1577 = vmatprep.subr.mxu0 %v780
        %1578 = vmatpush1.msra.mxu0 %v779
        %1579 = vmatprep.subr.mxu0 %v784
        %1580 = vmatpush1.msra.mxu0 %v783
        %1581 = vmatprep.subr.mxu0 %v788
        %1582 = vmatpush1.msra.mxu0 %v787
        %1583 = vmatprep.subr.mxu0 %v792
        %1584 = vmatpush1.msra.mxu0 %v791
        %1585 = vmatprep.subr.mxu0 %v796
        %1586 = vmatpush1.msra.mxu0 %v795
        %1587 = vmatprep.subr.mxu0 %v800
        %1588 = vmatpush1.msra.mxu0 %v799
        %1589 = vmatprep.subr.mxu0 0.0
        %1590 = vmatpush1.msra.mxu0 0.0
        %1591 = vmatprep.subr.mxu0 0.0
        %1592 = vmatpush1.msra.mxu0 0.0
        %1593 = vmatprep.subr.mxu0 0.0
        %1594 = vmatpush1.msra.mxu0 0.0
        %1595 = vmatprep.subr.mxu0 0.0
        %1596 = vmatpush1.msra.mxu0 0.0
        %1597 = vmatprep.subr.mxu0 0.0
        %1598 = vmatpush1.msra.mxu0 0.0
        %1599 = vmatprep.subr.mxu0 0.0
        %1600 = vmatpush1.msra.mxu0 0.0
        %1601 = vmatprep.subr.mxu0 0.0
        %1602 = vmatpush1.msra.mxu0 0.0
        %1603 = vmatprep.subr.mxu0 0.0
        %1604 = vmatpush1.msra.mxu0 0.0
        %1605 = vmatprep.subr.mxu0 0.0
        %1606 = vmatpush1.msra.mxu0 0.0
        %1607 = vmatprep.subr.mxu0 0.0
        %1608 = vmatpush1.msra.mxu0 0.0
        %1609 = vmatprep.subr.mxu0 0.0
        %1610 = vmatpush1.msra.mxu0 0.0
        %1611 = vmatprep.subr.mxu0 0.0
        %1612 = vmatpush1.msra.mxu0 0.0
        %1613 = vmatprep.subr.mxu0 0.0
        %1614 = vmatpush1.msra.mxu0 0.0
        %1615 = vmatprep.subr.mxu0 0.0
        %1616 = vmatpush1.msra.mxu0 0.0
        %1617 = vmatprep.subr.mxu0 0.0
        %1618 = vmatpush1.msra.mxu0 0.0
        %1619 = vmatprep.subr.mxu0 0.0
        %1620 = vmatpush1.msra.mxu0 0.0
        %1621 = vmatprep.mubr.f32.mxu0 0.0
        %1622 = vmatmul.mubr.f32.gmra.mrb[0].mxu0 %v1541
        %v1623 = vpop.f32.mrb[0].mxu0
        %v1624 = vadd.f32 0.0, %v1623
        %v1625 = vpop.f32.mrb[0].mxu0
        %v1626 = vadd.f32 0.0, %v1625
        %1627 = vdwg.mxu0
        %1628 = vmatprep.subr.mxu0 %v742
        %1629 = vmatpush1.msra.mxu0 %v741
        %1630 = vmatprep.subr.mxu0 %v746
        %1631 = vmatpush1.msra.mxu0 %v745
        %1632 = vmatprep.subr.mxu0 %v750
        %1633 = vmatpush1.msra.mxu0 %v749
        %1634 = vmatprep.subr.mxu0 %v754
        %1635 = vmatpush1.msra.mxu0 %v753
        %1636 = vmatprep.subr.mxu0 %v758
        %1637 = vmatpush1.msra.mxu0 %v757
        %1638 = vmatprep.subr.mxu0 %v762
        %1639 = vmatpush1.msra.mxu0 %v761
        %1640 = vmatprep.subr.mxu0 %v766
        %1641 = vmatpush1.msra.mxu0 %v765
        %1642 = vmatprep.subr.mxu0 %v770
        %1643 = vmatpush1.msra.mxu0 %v769
        %1644 = vmatprep.subr.mxu0 %v774
        %1645 = vmatpush1.msra.mxu0 %v773
        %1646 = vmatprep.subr.mxu0 %v778
        %1647 = vmatpush1.msra.mxu0 %v777
        %1648 = vmatprep.subr.mxu0 %v782
        %1649 = vmatpush1.msra.mxu0 %v781
        %1650 = vmatprep.subr.mxu0 %v786
        %1651 = vmatpush1.msra.mxu0 %v785
        %1652 = vmatprep.subr.mxu0 %v790
        %1653 = vmatpush1.msra.mxu0 %v789
        %1654 = vmatprep.subr.mxu0 %v794
        %1655 = vmatpush1.msra.mxu0 %v793
        %1656 = vmatprep.subr.mxu0 %v798
        %1657 = vmatpush1.msra.mxu0 %v797
        %1658 = vmatprep.subr.mxu0 %v802
        %1659 = vmatpush1.msra.mxu0 %v801
        %1660 = vmatprep.subr.mxu0 0.0
        %1661 = vmatpush1.msra.mxu0 0.0
        %1662 = vmatprep.subr.mxu0 0.0
        %1663 = vmatpush1.msra.mxu0 0.0
        %1664 = vmatprep.subr.mxu0 0.0
        %1665 = vmatpush1.msra.mxu0 0.0
        %1666 = vmatprep.subr.mxu0 0.0
        %1667 = vmatpush1.msra.mxu0 0.0
        %1668 = vmatprep.subr.mxu0 0.0
        %1669 = vmatpush1.msra.mxu0 0.0
        %1670 = vmatprep.subr.mxu0 0.0
        %1671 = vmatpush1.msra.mxu0 0.0
        %1672 = vmatprep.subr.mxu0 0.0
        %1673 = vmatpush1.msra.mxu0 0.0
        %1674 = vmatprep.subr.mxu0 0.0
        %1675 = vmatpush1.msra.mxu0 0.0
        %1676 = vmatprep.subr.mxu0 0.0
        %1677 = vmatpush1.msra.mxu0 0.0
        %1678 = vmatprep.subr.mxu0 0.0
        %1679 = vmatpush1.msra.mxu0 0.0
        %1680 = vmatprep.subr.mxu0 0.0
        %1681 = vmatpush1.msra.mxu0 0.0
        %1682 = vmatprep.subr.mxu0 0.0
        %1683 = vmatpush1.msra.mxu0 0.0
        %1684 = vmatprep.subr.mxu0 0.0
        %1685 = vmatpush1.msra.mxu0 0.0
        %1686 = vmatprep.subr.mxu0 0.0
        %1687 = vmatpush1.msra.mxu0 0.0
        %1688 = vmatprep.subr.mxu0 0.0
        %1689 = vmatpush1.msra.mxu0 0.0
        %1690 = vmatprep.subr.mxu0 0.0
        %1691 = vmatpush1.msra.mxu0 0.0
        %1692 = vmatprep.mubr.f32.mxu0 0.0
        %1693 = vmatmul.mubr.f32.gmra.mrb[0].mxu0 %v1541
        %v1694 = vpop.f32.mrb[0].mxu0
        %v1695 = vadd.f32 0.0, %v1694
        %v1696 = vpop.f32.mrb[0].mxu0
        %v1697 = vadd.f32 0.0, %v1696
        %1698 = vdwg.mxu0
        %v1699 = vadd.f32 %v1553, %v1624
        %v1700 = vadd.f32 %v1554, %v1626
        %v1701 = vadd.f32 %v1555, %v1695
        %v1702 = vadd.f32 %v1556, %v1697
        %v1703 = vxor.u32 %v1699, 2147483648
        %v1704 = vmul.f32 %v1703, 1.442695
        %v1705 = vpow.pop %v1704
        %v1706 = vadd.f32 %v1705, 1.0
        %v1707 = vrcp.pop %v1706
        %v1708 = vmul.f32 1.0, %v1707
        %v1709 = vxor.u32 %v1700, 2147483648
        %v1710 = vmul.f32 %v1709, 1.442695
        %v1711 = vpow.pop %v1710
        %v1712 = vadd.f32 %v1711, 1.0
        %v1713 = vrcp.pop %v1712
        %v1714 = vmul.f32 1.0, %v1713
        %v1715 = vtanh.pop %v1701
        %v1716 = vxor.u32 %v1702, 2147483648
        %v1717 = vmul.f32 %v1716, 1.442695
        %v1718 = vpow.pop %v1717
        %v1719 = vadd.f32 %v1718, 1.0
        %v1720 = vrcp.pop %v1719
        %v1721 = vmul.f32 1.0, %v1720
        %v1722 = vmul.f32 %v1714, %v1539
        %v1723 = vmul.f32 %v1708, %v1715
        %v1724 = vadd.f32 %v1722, %v1723
        %v1725 = vtanh.pop %v1724
        %v1726 = vmul.f32 %v1721, %v1725
        %s1727 = scalar_lea.vmem %s357, %s1547 [#allocation10]
        %1728 = vst [vmem:[%s1727] sm:$0xff] %v1726
        %s1729 = smul.u32 %s989, 5
        %s1730 = smul.u32 %s33, 2
        %s1731 = sadd.s32 %s1729, %s1730
        %s1732 = smul.u32 %s1731, 8
        %s1733 = sshra.s32 %s1732, 3
        %s1734 = sand.u32 %s1732, 7
        %s1735 = smul.u32 %s1733, 4
        %s1736 = smul.addr %s1735, 8
        %s1737 = scalar_lea.vmem [#allocation4], %s1736
        %v1738 = vld [vmem:[%s1737] sm:$0xff]
        %v1739 = vld [vmem:[%s1737 + $0x8] sm:$0xff]
        %v1740 = vld [vmem:[%s1737 + $0x10] sm:$0xff]
        %v1741 = vld [vmem:[%s1737 + $0x18] sm:$0xff]
        %1742 = vmatprep.subr.mxu0 %v740
        %1743 = vmatpush1.msra.mxu0 %v739
        %1744 = vmatprep.subr.mxu0 %v744
        %1745 = vmatpush1.msra.mxu0 %v743
        %1746 = vmatprep.subr.mxu0 %v748
        %1747 = vmatpush1.msra.mxu0 %v747
        %1748 = vmatprep.subr.mxu0 %v752
        %1749 = vmatpush1.msra.mxu0 %v751
        %1750 = vmatprep.subr.mxu0 %v756
        %1751 = vmatpush1.msra.mxu0 %v755
        %1752 = vmatprep.subr.mxu0 %v760
        %1753 = vmatpush1.msra.mxu0 %v759
        %1754 = vmatprep.subr.mxu0 %v764
        %1755 = vmatpush1.msra.mxu0 %v763
        %1756 = vmatprep.subr.mxu0 %v768
        %1757 = vmatpush1.msra.mxu0 %v767
        %1758 = vmatprep.subr.mxu0 %v772
        %1759 = vmatpush1.msra.mxu0 %v771
        %1760 = vmatprep.subr.mxu0 %v776
        %1761 = vmatpush1.msra.mxu0 %v775
        %1762 = vmatprep.subr.mxu0 %v780
        %1763 = vmatpush1.msra.mxu0 %v779
        %1764 = vmatprep.subr.mxu0 %v784
        %1765 = vmatpush1.msra.mxu0 %v783
        %1766 = vmatprep.subr.mxu0 %v788
        %1767 = vmatpush1.msra.mxu0 %v787
        %1768 = vmatprep.subr.mxu0 %v792
        %1769 = vmatpush1.msra.mxu0 %v791
        %1770 = vmatprep.subr.mxu0 %v796
        %1771 = vmatpush1.msra.mxu0 %v795
        %1772 = vmatprep.subr.mxu0 %v800
        %1773 = vmatpush1.msra.mxu0 %v799
        %1774 = vmatprep.subr.mxu0 0.0
        %1775 = vmatpush1.msra.mxu0 0.0
        %1776 = vmatprep.subr.mxu0 0.0
        %1777 = vmatpush1.msra.mxu0 0.0
        %1778 = vmatprep.subr.mxu0 0.0
        %1779 = vmatpush1.msra.mxu0 0.0
        %1780 = vmatprep.subr.mxu0 0.0
        %1781 = vmatpush1.msra.mxu0 0.0
        %1782 = vmatprep.subr.mxu0 0.0
        %1783 = vmatpush1.msra.mxu0 0.0
        %1784 = vmatprep.subr.mxu0 0.0
        %1785 = vmatpush1.msra.mxu0 0.0
        %1786 = vmatprep.subr.mxu0 0.0
        %1787 = vmatpush1.msra.mxu0 0.0
        %1788 = vmatprep.subr.mxu0 0.0
        %1789 = vmatpush1.msra.mxu0 0.0
        %1790 = vmatprep.subr.mxu0 0.0
        %1791 = vmatpush1.msra.mxu0 0.0
        %1792 = vmatprep.subr.mxu0 0.0
        %1793 = vmatpush1.msra.mxu0 0.0
        %1794 = vmatprep.subr.mxu0 0.0
        %1795 = vmatpush1.msra.mxu0 0.0
        %1796 = vmatprep.subr.mxu0 0.0
        %1797 = vmatpush1.msra.mxu0 0.0
        %1798 = vmatprep.subr.mxu0 0.0
        %1799 = vmatpush1.msra.mxu0 0.0
        %1800 = vmatprep.subr.mxu0 0.0
        %1801 = vmatpush1.msra.mxu0 0.0
        %1802 = vmatprep.subr.mxu0 0.0
        %1803 = vmatpush1.msra.mxu0 0.0
        %1804 = vmatprep.subr.mxu0 0.0
        %1805 = vmatpush1.msra.mxu0 0.0
        %1806 = vmatprep.mubr.f32.mxu0 0.0
        %1807 = vmatmul.mubr.f32.gmra.mrb[0].mxu0 %v1726
        %v1808 = vpop.f32.mrb[0].mxu0
        %v1809 = vadd.f32 0.0, %v1808
        %v1810 = vpop.f32.mrb[0].mxu0
        %v1811 = vadd.f32 0.0, %v1810
        %1812 = vdwg.mxu0
        %1813 = vmatprep.subr.mxu0 %v742
        %1814 = vmatpush1.msra.mxu0 %v741
        %1815 = vmatprep.subr.mxu0 %v746
        %1816 = vmatpush1.msra.mxu0 %v745
        %1817 = vmatprep.subr.mxu0 %v750
        %1818 = vmatpush1.msra.mxu0 %v749
        %1819 = vmatprep.subr.mxu0 %v754
        %1820 = vmatpush1.msra.mxu0 %v753
        %1821 = vmatprep.subr.mxu0 %v758
        %1822 = vmatpush1.msra.mxu0 %v757
        %1823 = vmatprep.subr.mxu0 %v762
        %1824 = vmatpush1.msra.mxu0 %v761
        %1825 = vmatprep.subr.mxu0 %v766
        %1826 = vmatpush1.msra.mxu0 %v765
        %1827 = vmatprep.subr.mxu0 %v770
        %1828 = vmatpush1.msra.mxu0 %v769
        %1829 = vmatprep.subr.mxu0 %v774
        %1830 = vmatpush1.msra.mxu0 %v773
        %1831 = vmatprep.subr.mxu0 %v778
        %1832 = vmatpush1.msra.mxu0 %v777
        %1833 = vmatprep.subr.mxu0 %v782
        %1834 = vmatpush1.msra.mxu0 %v781
        %1835 = vmatprep.subr.mxu0 %v786
        %1836 = vmatpush1.msra.mxu0 %v785
        %1837 = vmatprep.subr.mxu0 %v790
        %1838 = vmatpush1.msra.mxu0 %v789
        %1839 = vmatprep.subr.mxu0 %v794
        %1840 = vmatpush1.msra.mxu0 %v793
        %1841 = vmatprep.subr.mxu0 %v798
        %1842 = vmatpush1.msra.mxu0 %v797
        %1843 = vmatprep.subr.mxu0 %v802
        %1844 = vmatpush1.msra.mxu0 %v801
        %1845 = vmatprep.subr.mxu0 0.0
        %1846 = vmatpush1.msra.mxu0 0.0
        %1847 = vmatprep.subr.mxu0 0.0
        %1848 = vmatpush1.msra.mxu0 0.0
        %1849 = vmatprep.subr.mxu0 0.0
        %1850 = vmatpush1.msra.mxu0 0.0
        %1851 = vmatprep.subr.mxu0 0.0
        %1852 = vmatpush1.msra.mxu0 0.0
        %1853 = vmatprep.subr.mxu0 0.0
        %1854 = vmatpush1.msra.mxu0 0.0
        %1855 = vmatprep.subr.mxu0 0.0
        %1856 = vmatpush1.msra.mxu0 0.0
        %1857 = vmatprep.subr.mxu0 0.0
        %1858 = vmatpush1.msra.mxu0 0.0
        %1859 = vmatprep.subr.mxu0 0.0
        %1860 = vmatpush1.msra.mxu0 0.0
        %1861 = vmatprep.subr.mxu0 0.0
        %1862 = vmatpush1.msra.mxu0 0.0
        %1863 = vmatprep.subr.mxu0 0.0
        %1864 = vmatpush1.msra.mxu0 0.0
        %1865 = vmatprep.subr.mxu0 0.0
        %1866 = vmatpush1.msra.mxu0 0.0
        %1867 = vmatprep.subr.mxu0 0.0
        %1868 = vmatpush1.msra.mxu0 0.0
        %1869 = vmatprep.subr.mxu0 0.0
        %1870 = vmatpush1.msra.mxu0 0.0
        %1871 = vmatprep.subr.mxu0 0.0
        %1872 = vmatpush1.msra.mxu0 0.0
        %1873 = vmatprep.subr.mxu0 0.0
        %1874 = vmatpush1.msra.mxu0 0.0
        %1875 = vmatprep.subr.mxu0 0.0
        %1876 = vmatpush1.msra.mxu0 0.0
        %1877 = vmatprep.mubr.f32.mxu0 0.0
        %1878 = vmatmul.mubr.f32.gmra.mrb[0].mxu0 %v1726
        %v1879 = vpop.f32.mrb[0].mxu0
        %v1880 = vadd.f32 0.0, %v1879
        %v1881 = vpop.f32.mrb[0].mxu0
        %v1882 = vadd.f32 0.0, %v1881
        %1883 = vdwg.mxu0
        %v1884 = vadd.f32 %v1738, %v1809
        %v1885 = vadd.f32 %v1739, %v1811
        %v1886 = vadd.f32 %v1740, %v1880
        %v1887 = vadd.f32 %v1741, %v1882
        %v1888 = vxor.u32 %v1884, 2147483648
        %v1889 = vmul.f32 %v1888, 1.442695
        %v1890 = vpow.pop %v1889
        %v1891 = vadd.f32 %v1890, 1.0
        %v1892 = vrcp.pop %v1891
        %v1893 = vmul.f32 1.0, %v1892
        %v1894 = vxor.u32 %v1885, 2147483648
        %v1895 = vmul.f32 %v1894, 1.442695
        %v1896 = vpow.pop %v1895
        %v1897 = vadd.f32 %v1896, 1.0
        %v1898 = vrcp.pop %v1897
        %v1899 = vmul.f32 1.0, %v1898
        %v1900 = vtanh.pop %v1886
        %v1901 = vxor.u32 %v1887, 2147483648
        %v1902 = vmul.f32 %v1901, 1.442695
        %v1903 = vpow.pop %v1902
        %v1904 = vadd.f32 %v1903, 1.0
        %v1905 = vrcp.pop %v1904
        %v1906 = vmul.f32 1.0, %v1905
        %v1907 = vmul.f32 %v1899, %v1724
        %v1908 = vmul.f32 %v1893, %v1900
        %v1909 = vadd.f32 %v1907, %v1908
        %v1910 = vtanh.pop %v1909
        %v1911 = vmul.f32 %v1906, %v1910
        %s1912 = scalar_lea.vmem %s357, %s1732 [#allocation10]
        %1913 = vst [vmem:[%s1912] sm:$0xff] %v1911
        %s1914 = smul.u32 %s989, 6
        %s1915 = sadd.s32 %s1914, %s33
        %s1916 = smul.u32 %s1915, 8
        %s1917 = sshra.s32 %s1916, 3
        %s1918 = sand.u32 %s1916, 7
        %s1919 = smul.u32 %s1917, 4
        %s1920 = smul.addr %s1919, 8
        %s1921 = scalar_lea.vmem [#allocation4], %s1920
        %v1922 = vld [vmem:[%s1921] sm:$0xff]
        %v1923 = vld [vmem:[%s1921 + $0x8] sm:$0xff]
        %v1924 = vld [vmem:[%s1921 + $0x10] sm:$0xff]
        %v1925 = vld [vmem:[%s1921 + $0x18] sm:$0xff]
        %1926 = vmatprep.subr.mxu0 %v740
        %1927 = vmatpush1.msra.mxu0 %v739
        %1928 = vmatprep.subr.mxu0 %v744
        %1929 = vmatpush1.msra.mxu0 %v743
        %1930 = vmatprep.subr.mxu0 %v748
        %1931 = vmatpush1.msra.mxu0 %v747
        %1932 = vmatprep.subr.mxu0 %v752
        %1933 = vmatpush1.msra.mxu0 %v751
        %1934 = vmatprep.subr.mxu0 %v756
        %1935 = vmatpush1.msra.mxu0 %v755
        %1936 = vmatprep.subr.mxu0 %v760
        %1937 = vmatpush1.msra.mxu0 %v759
        %1938 = vmatprep.subr.mxu0 %v764
        %1939 = vmatpush1.msra.mxu0 %v763
        %1940 = vmatprep.subr.mxu0 %v768
        %1941 = vmatpush1.msra.mxu0 %v767
        %1942 = vmatprep.subr.mxu0 %v772
        %1943 = vmatpush1.msra.mxu0 %v771
        %1944 = vmatprep.subr.mxu0 %v776
        %1945 = vmatpush1.msra.mxu0 %v775
        %1946 = vmatprep.subr.mxu0 %v780
        %1947 = vmatpush1.msra.mxu0 %v779
        %1948 = vmatprep.subr.mxu0 %v784
        %1949 = vmatpush1.msra.mxu0 %v783
        %1950 = vmatprep.subr.mxu0 %v788
        %1951 = vmatpush1.msra.mxu0 %v787
        %1952 = vmatprep.subr.mxu0 %v792
        %1953 = vmatpush1.msra.mxu0 %v791
        %1954 = vmatprep.subr.mxu0 %v796
        %1955 = vmatpush1.msra.mxu0 %v795
        %1956 = vmatprep.subr.mxu0 %v800
        %1957 = vmatpush1.msra.mxu0 %v799
        %1958 = vmatprep.subr.mxu0 0.0
        %1959 = vmatpush1.msra.mxu0 0.0
        %1960 = vmatprep.subr.mxu0 0.0
        %1961 = vmatpush1.msra.mxu0 0.0
        %1962 = vmatprep.subr.mxu0 0.0
        %1963 = vmatpush1.msra.mxu0 0.0
        %1964 = vmatprep.subr.mxu0 0.0
        %1965 = vmatpush1.msra.mxu0 0.0
        %1966 = vmatprep.subr.mxu0 0.0
        %1967 = vmatpush1.msra.mxu0 0.0
        %1968 = vmatprep.subr.mxu0 0.0
        %1969 = vmatpush1.msra.mxu0 0.0
        %1970 = vmatprep.subr.mxu0 0.0
        %1971 = vmatpush1.msra.mxu0 0.0
        %1972 = vmatprep.subr.mxu0 0.0
        %1973 = vmatpush1.msra.mxu0 0.0
        %1974 = vmatprep.subr.mxu0 0.0
        %1975 = vmatpush1.msra.mxu0 0.0
        %1976 = vmatprep.subr.mxu0 0.0
        %1977 = vmatpush1.msra.mxu0 0.0
        %1978 = vmatprep.subr.mxu0 0.0
        %1979 = vmatpush1.msra.mxu0 0.0
        %1980 = vmatprep.subr.mxu0 0.0
        %1981 = vmatpush1.msra.mxu0 0.0
        %1982 = vmatprep.subr.mxu0 0.0
        %1983 = vmatpush1.msra.mxu0 0.0
        %1984 = vmatprep.subr.mxu0 0.0
        %1985 = vmatpush1.msra.mxu0 0.0
        %1986 = vmatprep.subr.mxu0 0.0
        %1987 = vmatpush1.msra.mxu0 0.0
        %1988 = vmatprep.subr.mxu0 0.0
        %1989 = vmatpush1.msra.mxu0 0.0
        %1990 = vmatprep.mubr.f32.mxu0 0.0
        %1991 = vmatmul.mubr.f32.gmra.mrb[0].mxu0 %v1911
        %v1992 = vpop.f32.mrb[0].mxu0
        %v1993 = vadd.f32 0.0, %v1992
        %v1994 = vpop.f32.mrb[0].mxu0
        %v1995 = vadd.f32 0.0, %v1994
        %1996 = vdwg.mxu0
        %1997 = vmatprep.subr.mxu0 %v742
        %1998 = vmatpush1.msra.mxu0 %v741
        %1999 = vmatprep.subr.mxu0 %v746
        %2000 = vmatpush1.msra.mxu0 %v745
        %2001 = vmatprep.subr.mxu0 %v750
        %2002 = vmatpush1.msra.mxu0 %v749
        %2003 = vmatprep.subr.mxu0 %v754
        %2004 = vmatpush1.msra.mxu0 %v753
        %2005 = vmatprep.subr.mxu0 %v758
        %2006 = vmatpush1.msra.mxu0 %v757
        %2007 = vmatprep.subr.mxu0 %v762
        %2008 = vmatpush1.msra.mxu0 %v761
        %2009 = vmatprep.subr.mxu0 %v766
        %2010 = vmatpush1.msra.mxu0 %v765
        %2011 = vmatprep.subr.mxu0 %v770
        %2012 = vmatpush1.msra.mxu0 %v769
        %2013 = vmatprep.subr.mxu0 %v774
        %2014 = vmatpush1.msra.mxu0 %v773
        %2015 = vmatprep.subr.mxu0 %v778
        %2016 = vmatpush1.msra.mxu0 %v777
        %2017 = vmatprep.subr.mxu0 %v782
        %2018 = vmatpush1.msra.mxu0 %v781
        %2019 = vmatprep.subr.mxu0 %v786
        %2020 = vmatpush1.msra.mxu0 %v785
        %2021 = vmatprep.subr.mxu0 %v790
        %2022 = vmatpush1.msra.mxu0 %v789
        %2023 = vmatprep.subr.mxu0 %v794
        %2024 = vmatpush1.msra.mxu0 %v793
        %2025 = vmatprep.subr.mxu0 %v798
        %2026 = vmatpush1.msra.mxu0 %v797
        %2027 = vmatprep.subr.mxu0 %v802
        %2028 = vmatpush1.msra.mxu0 %v801
        %2029 = vmatprep.subr.mxu0 0.0
        %2030 = vmatpush1.msra.mxu0 0.0
        %2031 = vmatprep.subr.mxu0 0.0
        %2032 = vmatpush1.msra.mxu0 0.0
        %2033 = vmatprep.subr.mxu0 0.0
        %2034 = vmatpush1.msra.mxu0 0.0
        %2035 = vmatprep.subr.mxu0 0.0
        %2036 = vmatpush1.msra.mxu0 0.0
        %2037 = vmatprep.subr.mxu0 0.0
        %2038 = vmatpush1.msra.mxu0 0.0
        %2039 = vmatprep.subr.mxu0 0.0
        %2040 = vmatpush1.msra.mxu0 0.0
        %2041 = vmatprep.subr.mxu0 0.0
        %2042 = vmatpush1.msra.mxu0 0.0
        %2043 = vmatprep.subr.mxu0 0.0
        %2044 = vmatpush1.msra.mxu0 0.0
        %2045 = vmatprep.subr.mxu0 0.0
        %2046 = vmatpush1.msra.mxu0 0.0
        %2047 = vmatprep.subr.mxu0 0.0
        %2048 = vmatpush1.msra.mxu0 0.0
        %2049 = vmatprep.subr.mxu0 0.0
        %2050 = vmatpush1.msra.mxu0 0.0
        %2051 = vmatprep.subr.mxu0 0.0
        %2052 = vmatpush1.msra.mxu0 0.0
        %2053 = vmatprep.subr.mxu0 0.0
        %2054 = vmatpush1.msra.mxu0 0.0
        %2055 = vmatprep.subr.mxu0 0.0
        %2056 = vmatpush1.msra.mxu0 0.0
        %2057 = vmatprep.subr.mxu0 0.0
        %2058 = vmatpush1.msra.mxu0 0.0
        %2059 = vmatprep.subr.mxu0 0.0
        %2060 = vmatpush1.msra.mxu0 0.0
        %2061 = vmatprep.mubr.f32.mxu0 0.0
        %2062 = vmatmul.mubr.f32.gmra.mrb[0].mxu0 %v1911
        %v2063 = vpop.f32.mrb[0].mxu0
        %v2064 = vadd.f32 0.0, %v2063
        %v2065 = vpop.f32.mrb[0].mxu0
        %v2066 = vadd.f32 0.0, %v2065
        %2067 = vdwg.mxu0
        %v2068 = vadd.f32 %v1922, %v1993
        %v2069 = vadd.f32 %v1923, %v1995
        %v2070 = vadd.f32 %v1924, %v2064
        %v2071 = vadd.f32 %v1925, %v2066
        %v2072 = vxor.u32 %v2068, 2147483648
        %v2073 = vmul.f32 %v2072, 1.442695
        %v2074 = vpow.pop %v2073
        %v2075 = vadd.f32 %v2074, 1.0
        %v2076 = vrcp.pop %v2075
        %v2077 = vmul.f32 1.0, %v2076
        %v2078 = vxor.u32 %v2069, 2147483648
        %v2079 = vmul.f32 %v2078, 1.442695
        %v2080 = vpow.pop %v2079
        %v2081 = vadd.f32 %v2080, 1.0
        %v2082 = vrcp.pop %v2081
        %v2083 = vmul.f32 1.0, %v2082
        %v2084 = vtanh.pop %v2070
        %v2085 = vxor.u32 %v2071, 2147483648
        %v2086 = vmul.f32 %v2085, 1.442695
        %v2087 = vpow.pop %v2086
        %v2088 = vadd.f32 %v2087, 1.0
        %v2089 = vrcp.pop %v2088
        %v2090 = vmul.f32 1.0, %v2089
        %v2091 = vmul.f32 %v2083, %v1909
        %v2092 = vmul.f32 %v2077, %v2084
        %v2093 = vadd.f32 %v2091, %v2092
        %v2094 = vtanh.pop %v2093
        %v2095 = vmul.f32 %v2090, %v2094
        %s2096 = scalar_lea.vmem %s357, %s1916 [#allocation10]
        %2097 = vst [vmem:[%s2096] sm:$0xff] %v2095
        %s2098 = smul.u32 %s989, 7
        %s2099 = smul.u32 %s989, 56
        %s2100 = sshra.s32 %s2099, 3
        %s2101 = sand.u32 %s2099, 7
        %s2102 = smul.u32 %s2100, 4
        %s2103 = smul.addr %s2102, 8
        %s2104 = scalar_lea.vmem [#allocation4], %s2103
        %v2105 = vld [vmem:[%s2104] sm:$0xff]
        %v2106 = vld [vmem:[%s2104 + $0x8] sm:$0xff]
        %v2107 = vld [vmem:[%s2104 + $0x10] sm:$0xff]
        %v2108 = vld [vmem:[%s2104 + $0x18] sm:$0xff]
        %2109 = vmatprep.subr.mxu0 %v740
        %2110 = vmatpush1.msra.mxu0 %v739
        %2111 = vmatprep.subr.mxu0 %v744
        %2112 = vmatpush1.msra.mxu0 %v743
        %2113 = vmatprep.subr.mxu0 %v748
        %2114 = vmatpush1.msra.mxu0 %v747
        %2115 = vmatprep.subr.mxu0 %v752
        %2116 = vmatpush1.msra.mxu0 %v751
        %2117 = vmatprep.subr.mxu0 %v756
        %2118 = vmatpush1.msra.mxu0 %v755
        %2119 = vmatprep.subr.mxu0 %v760
        %2120 = vmatpush1.msra.mxu0 %v759
        %2121 = vmatprep.subr.mxu0 %v764
        %2122 = vmatpush1.msra.mxu0 %v763
        %2123 = vmatprep.subr.mxu0 %v768
        %2124 = vmatpush1.msra.mxu0 %v767
        %2125 = vmatprep.subr.mxu0 %v772
        %2126 = vmatpush1.msra.mxu0 %v771
        %2127 = vmatprep.subr.mxu0 %v776
        %2128 = vmatpush1.msra.mxu0 %v775
        %2129 = vmatprep.subr.mxu0 %v780
        %2130 = vmatpush1.msra.mxu0 %v779
        %2131 = vmatprep.subr.mxu0 %v784
        %2132 = vmatpush1.msra.mxu0 %v783
        %2133 = vmatprep.subr.mxu0 %v788
        %2134 = vmatpush1.msra.mxu0 %v787
        %2135 = vmatprep.subr.mxu0 %v792
        %2136 = vmatpush1.msra.mxu0 %v791
        %2137 = vmatprep.subr.mxu0 %v796
        %2138 = vmatpush1.msra.mxu0 %v795
        %2139 = vmatprep.subr.mxu0 %v800
        %2140 = vmatpush1.msra.mxu0 %v799
        %2141 = vmatprep.subr.mxu0 0.0
        %2142 = vmatpush1.msra.mxu0 0.0
        %2143 = vmatprep.subr.mxu0 0.0
        %2144 = vmatpush1.msra.mxu0 0.0
        %2145 = vmatprep.subr.mxu0 0.0
        %2146 = vmatpush1.msra.mxu0 0.0
        %2147 = vmatprep.subr.mxu0 0.0
        %2148 = vmatpush1.msra.mxu0 0.0
        %2149 = vmatprep.subr.mxu0 0.0
        %2150 = vmatpush1.msra.mxu0 0.0
        %2151 = vmatprep.subr.mxu0 0.0
        %2152 = vmatpush1.msra.mxu0 0.0
        %2153 = vmatprep.subr.mxu0 0.0
        %2154 = vmatpush1.msra.mxu0 0.0
        %2155 = vmatprep.subr.mxu0 0.0
        %2156 = vmatpush1.msra.mxu0 0.0
        %2157 = vmatprep.subr.mxu0 0.0
        %2158 = vmatpush1.msra.mxu0 0.0
        %2159 = vmatprep.subr.mxu0 0.0
        %2160 = vmatpush1.msra.mxu0 0.0
        %2161 = vmatprep.subr.mxu0 0.0
        %2162 = vmatpush1.msra.mxu0 0.0
        %2163 = vmatprep.subr.mxu0 0.0
        %2164 = vmatpush1.msra.mxu0 0.0
        %2165 = vmatprep.subr.mxu0 0.0
        %2166 = vmatpush1.msra.mxu0 0.0
        %2167 = vmatprep.subr.mxu0 0.0
        %2168 = vmatpush1.msra.mxu0 0.0
        %2169 = vmatprep.subr.mxu0 0.0
        %2170 = vmatpush1.msra.mxu0 0.0
        %2171 = vmatprep.subr.mxu0 0.0
        %2172 = vmatpush1.msra.mxu0 0.0
        %2173 = vmatprep.mubr.f32.mxu0 0.0
        %2174 = vmatmul.mubr.f32.gmra.mrb[0].mxu0 %v2095
        %v2175 = vpop.f32.mrb[0].mxu0
        %v2176 = vadd.f32 0.0, %v2175
        %v2177 = vpop.f32.mrb[0].mxu0
        %v2178 = vadd.f32 0.0, %v2177
        %2179 = vdwg.mxu0
        %2180 = vmatprep.subr.mxu0 %v742
        %2181 = vmatpush1.msra.mxu0 %v741
        %2182 = vmatprep.subr.mxu0 %v746
        %2183 = vmatpush1.msra.mxu0 %v745
        %2184 = vmatprep.subr.mxu0 %v750
        %2185 = vmatpush1.msra.mxu0 %v749
        %2186 = vmatprep.subr.mxu0 %v754
        %2187 = vmatpush1.msra.mxu0 %v753
        %2188 = vmatprep.subr.mxu0 %v758
        %2189 = vmatpush1.msra.mxu0 %v757
        %2190 = vmatprep.subr.mxu0 %v762
        %2191 = vmatpush1.msra.mxu0 %v761
        %2192 = vmatprep.subr.mxu0 %v766
        %2193 = vmatpush1.msra.mxu0 %v765
        %2194 = vmatprep.subr.mxu0 %v770
        %2195 = vmatpush1.msra.mxu0 %v769
        %2196 = vmatprep.subr.mxu0 %v774
        %2197 = vmatpush1.msra.mxu0 %v773
        %2198 = vmatprep.subr.mxu0 %v778
        %2199 = vmatpush1.msra.mxu0 %v777
        %2200 = vmatprep.subr.mxu0 %v782
        %2201 = vmatpush1.msra.mxu0 %v781
        %2202 = vmatprep.subr.mxu0 %v786
        %2203 = vmatpush1.msra.mxu0 %v785
        %2204 = vmatprep.subr.mxu0 %v790
        %2205 = vmatpush1.msra.mxu0 %v789
        %2206 = vmatprep.subr.mxu0 %v794
        %2207 = vmatpush1.msra.mxu0 %v793
        %2208 = vmatprep.subr.mxu0 %v798
        %2209 = vmatpush1.msra.mxu0 %v797
        %2210 = vmatprep.subr.mxu0 %v802
        %2211 = vmatpush1.msra.mxu0 %v801
        %2212 = vmatprep.subr.mxu0 0.0
        %2213 = vmatpush1.msra.mxu0 0.0
        %2214 = vmatprep.subr.mxu0 0.0
        %2215 = vmatpush1.msra.mxu0 0.0
        %2216 = vmatprep.subr.mxu0 0.0
        %2217 = vmatpush1.msra.mxu0 0.0
        %2218 = vmatprep.subr.mxu0 0.0
        %2219 = vmatpush1.msra.mxu0 0.0
        %2220 = vmatprep.subr.mxu0 0.0
        %2221 = vmatpush1.msra.mxu0 0.0
        %2222 = vmatprep.subr.mxu0 0.0
        %2223 = vmatpush1.msra.mxu0 0.0
        %2224 = vmatprep.subr.mxu0 0.0
        %2225 = vmatpush1.msra.mxu0 0.0
        %2226 = vmatprep.subr.mxu0 0.0
        %2227 = vmatpush1.msra.mxu0 0.0
        %2228 = vmatprep.subr.mxu0 0.0
        %2229 = vmatpush1.msra.mxu0 0.0
        %2230 = vmatprep.subr.mxu0 0.0
        %2231 = vmatpush1.msra.mxu0 0.0
        %2232 = vmatprep.subr.mxu0 0.0
        %2233 = vmatpush1.msra.mxu0 0.0
        %2234 = vmatprep.subr.mxu0 0.0
        %2235 = vmatpush1.msra.mxu0 0.0
        %2236 = vmatprep.subr.mxu0 0.0
        %2237 = vmatpush1.msra.mxu0 0.0
        %2238 = vmatprep.subr.mxu0 0.0
        %2239 = vmatpush1.msra.mxu0 0.0
        %2240 = vmatprep.subr.mxu0 0.0
        %2241 = vmatpush1.msra.mxu0 0.0
        %2242 = vmatprep.subr.mxu0 0.0
        %2243 = vmatpush1.msra.mxu0 0.0
        %2244 = vmatprep.mubr.f32.mxu0 0.0
        %2245 = vmatmul.mubr.f32.gmra.mrb[0].mxu0 %v2095
        %v2246 = vpop.f32.mrb[0].mxu0
        %v2247 = vadd.f32 0.0, %v2246
        %v2248 = vpop.f32.mrb[0].mxu0
        %v2249 = vadd.f32 0.0, %v2248
        %2250 = vdwg.mxu0
        %v2251 = vadd.f32 %v2105, %v2176
        %v2252 = vadd.f32 %v2106, %v2178
        %v2253 = vadd.f32 %v2107, %v2247
        %v2254 = vadd.f32 %v2108, %v2249
        %v2255 = vxor.u32 %v2251, 2147483648
        %v2256 = vmul.f32 %v2255, 1.442695
        %v2257 = vpow.pop %v2256
        %v2258 = vadd.f32 %v2257, 1.0
        %v2259 = vrcp.pop %v2258
        %v2260 = vmul.f32 1.0, %v2259
        %v2261 = vxor.u32 %v2252, 2147483648
        %v2262 = vmul.f32 %v2261, 1.442695
        %v2263 = vpow.pop %v2262
        %v2264 = vadd.f32 %v2263, 1.0
        %v2265 = vrcp.pop %v2264
        %v2266 = vmul.f32 1.0, %v2265
        %v2267 = vtanh.pop %v2253
        %v2268 = vxor.u32 %v2254, 2147483648
        %v2269 = vmul.f32 %v2268, 1.442695
        %v2270 = vpow.pop %v2269
        %v2271 = vadd.f32 %v2270, 1.0
        %v2272 = vrcp.pop %v2271
        %v2273 = vmul.f32 1.0, %v2272
        %v2274 = vmul.f32 %v2266, %v2093
        %v2275 = vmul.f32 %v2260, %v2267
        %v2276 = vadd.f32 %v2274, %v2275
        %v2277 = vtanh.pop %v2276
        %v2278 = vmul.f32 %v2273, %v2277
        %s2279 = smul.u32 %s2098, 8
        %s2280 = scalar_lea.vmem %s357, %s2279 [#allocation10]
        %2281 = vst [vmem:[%s2280] sm:$0xff] %v2278
        %2282 = vst [vmem:[#allocation2] sm:$0xff] %v2278
        %2283 = vst [vmem:[#allocation3] sm:$0xff] %v2276
        %p2284 = scmp.eq.s32.totalorder %s34, 1
        // Predicated region
        $region49: #{tpu_custom_call.1} parent=35 // pred_check
          %p2285 = pneg %p2284
        $region50: #{tpu_custom_call.1} parent=35 // pred_check_branch
          %2287 = sbr.rel (%p2285) target = $region52
        $region51: #{tpu_custom_call.1} parent=35 // pred_region
          %2288 = vst [vmem:[%s364] sm:$0xff] %v2278
        $region52: #{tpu_custom_call.1} parent=35 // pred_fallthru
          _
        %s2289 = sand.u32 %s171, 1
        %s2290 = scalar_lea.sflag [#allocation7], %s2289
        %s2291 = sand.u32 %s171, 1
        %s2292 = smul.addr %s2291, 64
        %s2293 = scalar_lea.vmem [#allocation10], %s2292
        %s2294 = sand.u32 %s197, 1
        %s2295 = scalar_lea.sflag [#allocation12], %s2294
        %s2296 = sand.u32 %s197, 1
        %s2297 = smul.addr %s2296, 8
        %s2298 = scalar_lea.vmem [#allocation11], %s2297
        // Predicated region
        $region53: #{tpu_custom_call.1} parent=35 // pred_check
          %p2299 = pneg %p181
        $region54: #{tpu_custom_call.1} parent=35 // pred_check_branch
          %2301 = sbr.rel (%p2299) target = $region56
        $region55: #{tpu_custom_call.1} parent=35 // pred_region
          %s2302 = smul.u32 %s34, 2
          %s2303 = ssub.s32 1, %s2302
          %s2304 = smul.u32 %s33, %s2303
          %s2305 = sadd.s32 %s34, %s2304
          %s2306 = smul.u32 8, %s2305
          %s2308 = ssub.s32 1024, 1024
          %2309 = vsyncadd %s2290, %s2308
          %s2310 = smul.addr %s2306, 2
          %s2311 = sadd.s32 %s33, %s2310
          %s2312 = smul.addr %s2311, 128
          %s2313 = scalar_lea.hbm %s4, %s2312
          %s2314 = sshll.u32 %s2293, 4
          %s2315 = int_to_ptr.vmem [resolvable:$true] %s2314
          %2320 = dma.vmem_to_hbm [thread:$0]  %s2315, 1024, %s2313, %s2290, 128, 256, 8
        $region56: #{tpu_custom_call.1} parent=35 // pred_fallthru
          _
        // Predicated region
        $region57: #{tpu_custom_call.1} parent=35 // pred_check
          %p2321 = pneg %p207
        $region58: #{tpu_custom_call.1} parent=35 // pred_check_branch
          %2323 = sbr.rel (%p2321) target = $region60
        $region59: #{tpu_custom_call.1} parent=35 // pred_region
          %s2325 = ssub.s32 128, 128
          %2326 = vsyncadd %s2295, %s2325
          %s2327 = smul.addr %s33, 128
          %s2328 = scalar_lea.hbm %s5, %s2327
          %s2330 = sshll.u32 %s2298, 4
          %s2331 = int_to_ptr.vmem [resolvable:$true] %s2330
          %2333 = dma.vmem_to_hbm [thread:$0]  %s2331, 128, %s2328, %s2295
        $region60: #{tpu_custom_call.1} parent=35 // pred_fallthru
          _
      $region36: #{tpu_custom_call.1} parent=5 // pred_fallthru
        _
      %p2334 = scmp.le.s32.totalorder 2, %s24
      // Predicated region
      $region61: #{tpu_custom_call.1} parent=5 // pred_check
        %p2335 = pneg %p2334
      $region62: #{tpu_custom_call.1} parent=5 // pred_check_branch
        %2337 = sbr.rel (%p2335) target = $region64
      $region63: #{tpu_custom_call.1} parent=5 // pred_region
        %s2338 = ssub.s32 %s24, 2
        // Predicated region
        $region65: #{tpu_custom_call.1} parent=63 // pred_check
          %p2339 = pneg %p187
        $region66: #{tpu_custom_call.1} parent=63 // pred_check_branch
          %2341 = sbr.rel (%p2339) target = $region68
        $region67: #{tpu_custom_call.1} parent=63 // pred_region
          %s2342 = sand.u32 %s172, 1
          %s2343 = scalar_lea.sflag [#allocation7], %s2342
          %s2344 = sand.u32 %s172, 1
          %s2345 = smul.addr %s2344, 64
          %s2346 = scalar_lea.vmem [#allocation10], %s2345
          %2347 = dma.done %s2343, 1024
        $region68: #{tpu_custom_call.1} parent=63 // pred_fallthru
          _
        // Predicated region
        $region69: #{tpu_custom_call.1} parent=63 // pred_check
          %p2348 = pneg %p213
        $region70: #{tpu_custom_call.1} parent=63 // pred_check_branch
          %2350 = sbr.rel (%p2348) target = $region72
        $region71: #{tpu_custom_call.1} parent=63 // pred_region
          %s2351 = sand.u32 %s198, 1
          %s2352 = scalar_lea.sflag [#allocation12], %s2351
          %s2353 = sand.u32 %s198, 1
          %s2354 = smul.addr %s2353, 8
          %s2355 = scalar_lea.vmem [#allocation11], %s2354
          %2356 = dma.done %s2352, 128
        $region72: #{tpu_custom_call.1} parent=63 // pred_fallthru
          _
      $region64: #{tpu_custom_call.1} parent=5 // pred_fallthru
        _
    $region6: #{tpu_custom_call.1} parent=1 // loop_footer
      %s28 = sadd.s32 1, %s24
    $region7: #{tpu_custom_call.1} parent=1 // loop_footer_branch
      %23 = sbr.rel target = $region3
    $region8: #{tpu_custom_call.1} parent=1 // loop_exit
      _
    %2357 = vsyncpa [#allocation6], 1
    %s2358 = scalar_lea.sflag [#allocation6], 1
    %2359 = vsyncpa %s2358, 1
    %2360 = vsyncpa [#allocation9], 1
    %s2361 = scalar_lea.sflag [#allocation9], 1
    %2362 = vsyncpa %s2361, 1
    %2363 = vsyncpa [#allocation7], 1
    %s2364 = scalar_lea.sflag [#allocation7], 1
    %2365 = vsyncpa %s2364, 1
    %2366 = vsyncpa [#allocation12], 1
    %s2367 = scalar_lea.sflag [#allocation12], 1
    %2368 = vsyncpa %s2367, 1

</llo_original>
